<compile_context>
chip_gen: v6e
topology: v6e:2x2x1
jax: 0.10.0
libtpu: 0.0.40
codegen_flags: <defaults>
</compile_context>

<pallas_src>
import functools

import numpy as np
import jax
import jax.numpy as jnp
from jax import lax
from jax.experimental import pallas as pl
from jax.experimental.pallas import tpu as pltpu


_HALF = 128  # lane width of each pooling half-block (even / odd output columns)


def _round_up(n, m):
    return ((n + m - 1) // m) * m


# ------------------------------ fused kernel ------------------------------- #

def _net_kernel(x_ref, b1w_ref, b1b_ref, b2w_ref, b2b_ref,
                f1w_ref, f1b_ref, f2w_ref, f2b_ref, o_ref, *, tb):
    s1 = 6 * tb  # rows per conv1 row-parity group (6 output rows x tb images)

    def col_pool(a):            # max over even/odd output-column half-blocks
        return jnp.maximum(a[:, :_HALF], a[:, _HALF:2 * _HALF])

    # ---- conv1 (5x5, 1->10): a single MXU matmul for the whole batch tile ----
    # x rows are ordered (g, t, b): g = out_row % 4, t = out_row // 4, b = image;
    # K index = ky*28 + ix (the 5 row taps concatenated by the wrapper).
    xc = x_ref[0]                                                         # (24*tb, 140) bf16
    rg = jnp.dot(xc, b1w_ref[...], preferred_element_type=jnp.float32)    # (24*tb, 256) f32

    # 2x2 max pool (cols: lane halves, rows: parity groups), then bias + ReLU
    # (bias is constant over the pooling window and ReLU is monotone -> exact).
    b1b = b1b_ref[...]
    h1_e = jnp.maximum(jnp.maximum(col_pool(rg[0 * s1:1 * s1]),
                                   col_pool(rg[1 * s1:2 * s1])) + b1b, 0.0)
    h1_o = jnp.maximum(jnp.maximum(col_pool(rg[2 * s1:3 * s1]),
                                   col_pool(rg[3 * s1:4 * s1])) + b1b, 0.0)
    # h1_e/h1_o: (6*tb, 128); row t*tb+b = pooled row 2t / 2t+1 of image b,
    # lane m*10+ci (pooled col m, channel ci); lanes >= 120 are zero.
    h1 = (h1_e.astype(jnp.bfloat16), h1_o.astype(jnp.bfloat16))

    # ---- conv2 (5x5, 10->20); Dropout2d is identity in eval mode ----
    # TODO(synk): training-mode dropout (Dropout2d / F.dropout) not implemented;
    #             eval semantics only.
    pars = []
    for p in range(2):
        acc = None
        for ky in range(5):
            sh = p + ky                                                   # needed h1 row = 2u + sh
            lhs = h1[sh % 2][(sh // 2) * tb:(sh // 2 + 4) * tb, :]        # (4*tb, 128)
            part = jnp.dot(lhs, b2w_ref[ky], preferred_element_type=jnp.float32)
            acc = part if acc is None else acc + part                     # (4*tb, 256)
        pars.append(acc)

    h2 = jnp.maximum(jnp.maximum(col_pool(pars[0]), col_pool(pars[1])) + b2b_ref[...], 0.0)
    # h2: (4*tb, 128); row u*tb+b = pooled conv2 row u of image b,
    # lane m*20+co (pooled col m, channel co); lanes >= 80 are zero.
    h2b = h2.astype(jnp.bfloat16)

    # ---- fc1 (320->50) + ReLU; F.dropout(training=False) is identity ----
    f1 = f1b_ref[...]                                                     # (1, 50)
    for u in range(4):
        f1 = f1 + jnp.dot(h2b[u * tb:(u + 1) * tb, :], f1w_ref[u],
                          preferred_element_type=jnp.float32)             # (tb, 50)
    f1 = jnp.maximum(f1, 0.0)

    # ---- fc2 (50->10, columns zero-padded to 128 lanes) + log_softmax ----
    # Padding lanes carry a -1e30 bias, so they don't affect max/sum and the
    # wrapper simply slices the first 10 lanes.
    logits = jnp.dot(f1.astype(jnp.bfloat16), f2w_ref[...],
                     preferred_element_type=jnp.float32) + f2b_ref[...]   # (tb, 128)
    m = jnp.max(logits, axis=-1, keepdims=True)
    z = logits - m
    lse = jnp.log(jnp.sum(jnp.exp(z), axis=-1, keepdims=True))
    o_ref[0] = (z - lse).astype(o_ref.dtype)


# ------------------------- trace-time weight builders ----------------------- #

def _banded_conv_weights(w_hwio, *, in_w, in_lanes, half):
    """For each kernel row ky, build a (in_lanes, 2*half) matrix so that an input
    row (lane layout ix*Cin+ci) @ B[ky] equals the width-direction conv for that
    row tap, with output columns laid out as [even ox | odd ox] (each block
    ordered (ox//2)*Cout+co and zero-padded to `half` lanes)."""
    KH, KW, CI, CO = w_hwio.shape
    OW = in_w - KW + 1
    assert OW % 2 == 0 and (OW // 2) * CO <= half and in_w * CI <= in_lanes
    kx = np.arange(KW)[:, None, None]
    ix = np.arange(in_w)[None, :, None]
    ox = np.arange(OW)[None, None, :]
    ind = (ix == ox + kx).astype(np.float32)                       # (KW, in_w, OW), static
    B = jnp.einsum("xio,yxcd->yicod", jnp.asarray(ind), w_hwio)    # (KH, in_w, CI, OW, CO)
    B = B.reshape(KH, in_w * CI, OW * CO)                          # rows ix*CI+ci, cols ox*CO+co
    cols = np.arange(OW * CO)
    oxs, cos = cols // CO, cols % CO
    dest = (oxs % 2) * half + (oxs // 2) * CO + cos                # pool-friendly column layout
    out = jnp.zeros((KH, in_lanes, 2 * half), B.dtype)
    return out.at[:, : in_w * CI, dest].set(B)


def net_forward(x_nchw, params, tb=64):
    N = x_nchw.shape[0]
    assert x_nchw.shape[1:] == (1, 28, 28), x_nchw.shape
    f32 = jnp.float32

    # batch tile: multiple of 8, no larger than needed; pad the batch to NG*TB
    TB = max(8, (min(int(tb), _round_up(N, 8)) // 8) * 8)
    NP = _round_up(N, TB)
    NG = NP // TB

    xp = x_nchw[:, 0].astype(f32)                                   # (N, 28, 28)
    if NP != N:
        xp = jnp.concatenate([xp, jnp.zeros((NP - N, 28, 28), f32)], axis=0)

    # conv1 LHS slab: for output-row-parity group g and t = out_row // 4, gather
    # input rows 4t+g+ky (ky = 0..4) and concatenate them along K (5*28 = 140).
    idx = (np.arange(4)[:, None, None] + 4 * np.arange(6)[None, :, None]
           + np.arange(5)[None, None, :])                           # (4, 6, 5) -> row 4t+g+ky
    xg = xp[:, idx, :]                                              # (NP, 4, 6, 5, 28)
    xg = xg.reshape(NG, TB, 4, 6, 140).transpose(0, 2, 3, 1, 4)     # (NG, 4, 6, TB, 140)
    xc = xg.reshape(NG, 24 * TB, 140).astype(jnp.bfloat16)          # rows g*6TB + t*TB + b

    # banded conv weights (built once at trace time), MXU operands in bf16
    B1 = _banded_conv_weights(params["w1"].astype(f32), in_w=28, in_lanes=28, half=_HALF)
    B1cat = B1.reshape(5 * 28, 2 * _HALF).astype(jnp.bfloat16)      # (140, 256), rows ky*28+ix
    B2 = _banded_conv_weights(params["w2"].astype(f32), in_w=12, in_lanes=_HALF,
                              half=_HALF).astype(jnp.bfloat16)      # (5, 128, 256)

    b1row = jnp.zeros((1, _HALF), f32).at[0, :120].set(jnp.tile(params["b1"].astype(f32), 12))
    b2row = jnp.zeros((1, _HALF), f32).at[0, :80].set(jnp.tile(params["b2"].astype(f32), 4))

    # fc1 weight permuted to the in-kernel h2 layout (row u, lane m*20+co),
    # matching torch's x.view(-1, 320) NCHW flatten (index co*16 + u*4 + m).
    idxf = np.empty((4, 80), np.int32)
    for u in range(4):
        for m in range(4):
            for co in range(20):
                idxf[u, m * 20 + co] = co * 16 + u * 4 + m
    wf1p = (jnp.zeros((4, _HALF, 50), f32)
            .at[:, :80, :].set(params["wf1"].astype(f32)[idxf])).astype(jnp.bfloat16)
    bf1row = params["bf1"].astype(f32).reshape(1, 50)

    # fc2 weight/bias padded to a lane-dense 128-wide output slab
    wf2p = (jnp.zeros((50, _HALF), f32)
            .at[:, :10].set(params["wf2"].astype(f32))).astype(jnp.bfloat16)
    bf2row = jnp.full((1, _HALF), -1e30, f32).at[0, :10].set(params["bf2"].astype(f32))

    out = pl.pallas_call(
        functools.partial(_net_kernel, tb=TB),
        out_shape=jax.ShapeDtypeStruct((NG, TB, _HALF), jnp.float32),
        grid=(NG,),
        in_specs=[
            pl.BlockSpec((1, 24 * TB, 140), lambda i: (i, 0, 0)),     # conv1 LHS slab
            pl.BlockSpec((140, 2 * _HALF), lambda i: (0, 0)),         # B1 (ky-concat)
            pl.BlockSpec((1, _HALF), lambda i: (0, 0)),               # conv1 bias row
            pl.BlockSpec((5, _HALF, 2 * _HALF), lambda i: (0, 0, 0)), # B2
            pl.BlockSpec((1, _HALF), lambda i: (0, 0)),               # conv2 bias row
            pl.BlockSpec((4, _HALF, 50), lambda i: (0, 0, 0)),        # fc1 weight (permuted)
            pl.BlockSpec((1, 50), lambda i: (0, 0)),                  # fc1 bias
            pl.BlockSpec((50, _HALF), lambda i: (0, 0)),              # fc2 weight (padded)
            pl.BlockSpec((1, _HALF), lambda i: (0, 0)),               # fc2 bias (padded)
        ],
        out_specs=pl.BlockSpec((1, TB, _HALF), lambda i: (i, 0, 0)),
        compiler_params=pltpu.CompilerParams(dimension_semantics=("parallel",)),
    )(xc, B1cat, b1row, B2, b2row, wf1p, bf1row, wf2p, bf2row)

    return out.reshape(NP, _HALF)[:N, :10]


# ----------------------- independent pure-JAX reference --------------------- #

def reference_forward(x_nchw, params):
    x = jnp.transpose(x_nchw, (0, 2, 3, 1)).astype(jnp.float32)
    dn = ("NHWC", "HWIO", "NHWC")
    y = lax.conv_general_dilated(x, params["w1"], (1, 1), "VALID",
                                 dimension_numbers=dn) + params["b1"]
    y = lax.reduce_window(y, -jnp.inf, lax.max, (1, 2, 2, 1), (1, 2, 2, 1), "VALID")
    y = jnp.maximum(y, 0.0)
    y = lax.conv_general_dilated(y, params["w2"], (1, 1), "VALID",
                                 dimension_numbers=dn) + params["b2"]
    y = lax.reduce_window(y, -jnp.inf, lax.max, (1, 2, 2, 1), (1, 2, 2, 1), "VALID")
    y = jnp.maximum(y, 0.0)
    y = jnp.transpose(y, (0, 3, 1, 2)).reshape(x.shape[0], 320)
    y = jnp.maximum(y @ params["wf1"] + params["bf1"], 0.0)
    y = y @ params["wf2"] + params["bf2"]
    return jax.nn.log_softmax(y, axis=-1)


# ----------------------------------- main ----------------------------------- #

if __name__ == "__main__":
    key = jax.random.PRNGKey(0)
    kx, k1, k2, k3, k4, k5, k6, k7, k8 = jax.random.split(key, 9)

    # input consistent with the module: 320 = 20*4*4 implies 1x28x28 images
    params = {
        "w1": 0.1 * jax.random.normal(k1, (5, 5, 1, 10), jnp.float32),   # HWIO
        "b1": 0.1 * jax.random.normal(k2, (10,), jnp.float32),
        "w2": 0.1 * jax.random.normal(k3, (5, 5, 10, 20), jnp.float32),  # HWIO
        "b2": 0.1 * jax.random.normal(k4, (20,), jnp.float32),
        "wf1": 0.1 * jax.random.normal(k5, (320, 50), jnp.float32),      # (in, out)
        "bf1": 0.1 * jax.random.normal(k6, (50,), jnp.float32),
        "wf2": 0.1 * jax.random.normal(k7, (50, 10), jnp.float32),
        "bf2": 0.1 * jax.random.normal(k8, (10,), jnp.float32),
    }

    fwd = jax.jit(net_forward, static_argnames=("tb",))

    # batch=2 (single grid step, heavy padding) and a larger batch that exercises
    # the multi-step grid plus the non-multiple-of-TB tail path.
    for n, tb in ((2, 8), (37, 16)):
        x = jax.random.normal(kx, (n, 1, 28, 28), dtype=jnp.float32)
        out = jax.block_until_ready(fwd(x, params, tb=tb))
        ref = jax.block_until_ready(reference_forward(x, params))
        assert out.shape == (n, 10), out.shape
        # bf16 MXU operands with f32 accumulation -> loosened tolerance vs f32 ref
        np.testing.assert_allclose(np.asarray(out), np.asarray(ref), atol=1e-1, rtol=5e-2)

    print("KERNEL_OK")
</pallas_src>

<mosaic_0001>
module attributes {stable_mosaic.version = 11 : i64} {
  func.func @_net_kernel(%arg0: i32, %arg1: memref<1x192x140xbf16, #tpu.memory_space<vmem>>, %arg2: memref<140x256xbf16, #tpu.memory_space<vmem>>, %arg3: memref<1x128xf32, #tpu.memory_space<vmem>>, %arg4: memref<5x128x256xbf16, #tpu.memory_space<vmem>>, %arg5: memref<1x128xf32, #tpu.memory_space<vmem>>, %arg6: memref<4x128x50xbf16, #tpu.memory_space<vmem>>, %arg7: memref<1x50xf32, #tpu.memory_space<vmem>>, %arg8: memref<50x128xbf16, #tpu.memory_space<vmem>>, %arg9: memref<1x128xf32, #tpu.memory_space<vmem>>, %arg10: memref<1x8x128xf32, #tpu.memory_space<vmem>>) attributes {dimension_semantics = [#tpu.dimension_semantics<parallel>], iteration_bounds = array<i64: 1>, scalar_prefetch = 0 : i64, scratch_operands = 0 : i64, tpu.core_type = #tpu.core_type<tc>, window_params = [{transform_indices = @transform_0, window_bounds = array<i64: 1, 192, 140>}, {pipeline_mode = #tpu.pipeline_mode<synchronous>, transform_indices = @transform_1, window_bounds = array<i64: 140, 256>}, {pipeline_mode = #tpu.pipeline_mode<synchronous>, transform_indices = @transform_2, window_bounds = array<i64: 1, 128>}, {pipeline_mode = #tpu.pipeline_mode<synchronous>, transform_indices = @transform_3, window_bounds = array<i64: 5, 128, 256>}, {pipeline_mode = #tpu.pipeline_mode<synchronous>, transform_indices = @transform_4, window_bounds = array<i64: 1, 128>}, {pipeline_mode = #tpu.pipeline_mode<synchronous>, transform_indices = @transform_5, window_bounds = array<i64: 4, 128, 50>}, {pipeline_mode = #tpu.pipeline_mode<synchronous>, transform_indices = @transform_6, window_bounds = array<i64: 1, 50>}, {pipeline_mode = #tpu.pipeline_mode<synchronous>, transform_indices = @transform_7, window_bounds = array<i64: 50, 128>}, {pipeline_mode = #tpu.pipeline_mode<synchronous>, transform_indices = @transform_8, window_bounds = array<i64: 1, 128>}, {transform_indices = @transform_9, window_bounds = array<i64: 1, 8, 128>}]} {
    %c0 = arith.constant 0 : index
    %c0_0 = arith.constant 0 : index
    %c0_1 = arith.constant 0 : index
    %0 = vector.load %arg1[%c0, %c0_0, %c0_1] : memref<1x192x140xbf16, #tpu.memory_space<vmem>>, vector<1x192x140xbf16>
    %1 = vector.shape_cast %0 : vector<1x192x140xbf16> to vector<192x140xbf16>
    %c0_2 = arith.constant 0 : index
    %c0_3 = arith.constant 0 : index
    %2 = vector.load %arg2[%c0_2, %c0_3] : memref<140x256xbf16, #tpu.memory_space<vmem>>, vector<140x256xbf16>
    %cst = arith.constant dense<0.000000e+00> : vector<192x256xf32>
    %3 = tpu.matmul %1, %2, %cst {dimension_numbers = #tpu.dot_dimension_numbers<[1], [0], [0], [1], [0, 0, 1, 1], [], []>} : vector<192x140xbf16>, vector<140x256xbf16>, vector<192x256xf32> -> vector<192x256xf32>
    %c0_4 = arith.constant 0 : index
    %c0_5 = arith.constant 0 : index
    %4 = vector.load %arg3[%c0_4, %c0_5] : memref<1x128xf32, #tpu.memory_space<vmem>>, vector<1x128xf32>
    %5 = vector.extract_strided_slice %3 {offsets = [0, 0], sizes = [48, 256], strides = [1, 1]} : vector<192x256xf32> to vector<48x256xf32>
    %6 = vector.extract_strided_slice %5 {offsets = [0, 0], sizes = [48, 128], strides = [1, 1]} : vector<48x256xf32> to vector<48x128xf32>
    %7 = vector.extract_strided_slice %5 {offsets = [0, 128], sizes = [48, 128], strides = [1, 1]} : vector<48x256xf32> to vector<48x128xf32>
    %8 = arith.maximumf %6, %7 : vector<48x128xf32>
    %9 = vector.extract_strided_slice %3 {offsets = [48, 0], sizes = [48, 256], strides = [1, 1]} : vector<192x256xf32> to vector<48x256xf32>
    %10 = vector.extract_strided_slice %9 {offsets = [0, 0], sizes = [48, 128], strides = [1, 1]} : vector<48x256xf32> to vector<48x128xf32>
    %11 = vector.extract_strided_slice %9 {offsets = [0, 128], sizes = [48, 128], strides = [1, 1]} : vector<48x256xf32> to vector<48x128xf32>
    %12 = arith.maximumf %10, %11 : vector<48x128xf32>
    %13 = arith.maximumf %8, %12 : vector<48x128xf32>
    %14 = vector.broadcast %4 : vector<1x128xf32> to vector<48x128xf32>
    %15 = arith.addf %13, %14 : vector<48x128xf32>
    %cst_6 = arith.constant 0.000000e+00 : f32
    %16 = vector.broadcast %cst_6 : f32 to vector<48x128xf32>
    %17 = arith.maximumf %15, %16 : vector<48x128xf32>
    %18 = vector.extract_strided_slice %3 {offsets = [96, 0], sizes = [48, 256], strides = [1, 1]} : vector<192x256xf32> to vector<48x256xf32>
    %19 = vector.extract_strided_slice %18 {offsets = [0, 0], sizes = [48, 128], strides = [1, 1]} : vector<48x256xf32> to vector<48x128xf32>
    %20 = vector.extract_strided_slice %18 {offsets = [0, 128], sizes = [48, 128], strides = [1, 1]} : vector<48x256xf32> to vector<48x128xf32>
    %21 = arith.maximumf %19, %20 : vector<48x128xf32>
    %22 = vector.extract_strided_slice %3 {offsets = [144, 0], sizes = [48, 256], strides = [1, 1]} : vector<192x256xf32> to vector<48x256xf32>
    %23 = vector.extract_strided_slice %22 {offsets = [0, 0], sizes = [48, 128], strides = [1, 1]} : vector<48x256xf32> to vector<48x128xf32>
    %24 = vector.extract_strided_slice %22 {offsets = [0, 128], sizes = [48, 128], strides = [1, 1]} : vector<48x256xf32> to vector<48x128xf32>
    %25 = arith.maximumf %23, %24 : vector<48x128xf32>
    %26 = arith.maximumf %21, %25 : vector<48x128xf32>
    %27 = vector.broadcast %4 : vector<1x128xf32> to vector<48x128xf32>
    %28 = arith.addf %26, %27 : vector<48x128xf32>
    %cst_7 = arith.constant 0.000000e+00 : f32
    %29 = vector.broadcast %cst_7 : f32 to vector<48x128xf32>
    %30 = arith.maximumf %28, %29 : vector<48x128xf32>
    %31 = arith.truncf %17 : vector<48x128xf32> to vector<48x128xbf16>
    %32 = arith.truncf %30 : vector<48x128xf32> to vector<48x128xbf16>
    %33 = vector.extract_strided_slice %31 {offsets = [0, 0], sizes = [32, 128], strides = [1, 1]} : vector<48x128xbf16> to vector<32x128xbf16>
    %c0_8 = arith.constant 0 : index
    %c0_9 = arith.constant 0 : index
    %c0_10 = arith.constant 0 : index
    %34 = vector.load %arg4[%c0_8, %c0_9, %c0_10] : memref<5x128x256xbf16, #tpu.memory_space<vmem>>, vector<1x128x256xbf16>
    %35 = vector.shape_cast %34 : vector<1x128x256xbf16> to vector<128x256xbf16>
    %cst_11 = arith.constant dense<0.000000e+00> : vector<32x256xf32>
    %36 = tpu.matmul %33, %35, %cst_11 {dimension_numbers = #tpu.dot_dimension_numbers<[1], [0], [0], [1], [0, 0, 1, 1], [], []>} : vector<32x128xbf16>, vector<128x256xbf16>, vector<32x256xf32> -> vector<32x256xf32>
    %37 = vector.extract_strided_slice %32 {offsets = [0, 0], sizes = [32, 128], strides = [1, 1]} : vector<48x128xbf16> to vector<32x128xbf16>
    %c1 = arith.constant 1 : index
    %c0_12 = arith.constant 0 : index
    %c0_13 = arith.constant 0 : index
    %38 = vector.load %arg4[%c1, %c0_12, %c0_13] : memref<5x128x256xbf16, #tpu.memory_space<vmem>>, vector<1x128x256xbf16>
    %39 = vector.shape_cast %38 : vector<1x128x256xbf16> to vector<128x256xbf16>
    %cst_14 = arith.constant dense<0.000000e+00> : vector<32x256xf32>
    %40 = tpu.matmul %37, %39, %cst_14 {dimension_numbers = #tpu.dot_dimension_numbers<[1], [0], [0], [1], [0, 0, 1, 1], [], []>} : vector<32x128xbf16>, vector<128x256xbf16>, vector<32x256xf32> -> vector<32x256xf32>
    %41 = arith.addf %36, %40 : vector<32x256xf32>
    %42 = vector.extract_strided_slice %31 {offsets = [8, 0], sizes = [32, 128], strides = [1, 1]} : vector<48x128xbf16> to vector<32x128xbf16>
    %c2 = arith.constant 2 : index
    %c0_15 = arith.constant 0 : index
    %c0_16 = arith.constant 0 : index
    %43 = vector.load %arg4[%c2, %c0_15, %c0_16] : memref<5x128x256xbf16, #tpu.memory_space<vmem>>, vector<1x128x256xbf16>
    %44 = vector.shape_cast %43 : vector<1x128x256xbf16> to vector<128x256xbf16>
    %cst_17 = arith.constant dense<0.000000e+00> : vector<32x256xf32>
    %45 = tpu.matmul %42, %44, %cst_17 {dimension_numbers = #tpu.dot_dimension_numbers<[1], [0], [0], [1], [0, 0, 1, 1], [], []>} : vector<32x128xbf16>, vector<128x256xbf16>, vector<32x256xf32> -> vector<32x256xf32>
    %46 = arith.addf %41, %45 : vector<32x256xf32>
    %47 = vector.extract_strided_slice %32 {offsets = [8, 0], sizes = [32, 128], strides = [1, 1]} : vector<48x128xbf16> to vector<32x128xbf16>
    %c3 = arith.constant 3 : index
    %c0_18 = arith.constant 0 : index
    %c0_19 = arith.constant 0 : index
    %48 = vector.load %arg4[%c3, %c0_18, %c0_19] : memref<5x128x256xbf16, #tpu.memory_space<vmem>>, vector<1x128x256xbf16>
    %49 = vector.shape_cast %48 : vector<1x128x256xbf16> to vector<128x256xbf16>
    %cst_20 = arith.constant dense<0.000000e+00> : vector<32x256xf32>
    %50 = tpu.matmul %47, %49, %cst_20 {dimension_numbers = #tpu.dot_dimension_numbers<[1], [0], [0], [1], [0, 0, 1, 1], [], []>} : vector<32x128xbf16>, vector<128x256xbf16>, vector<32x256xf32> -> vector<32x256xf32>
    %51 = arith.addf %46, %50 : vector<32x256xf32>
    %52 = vector.extract_strided_slice %31 {offsets = [16, 0], sizes = [32, 128], strides = [1, 1]} : vector<48x128xbf16> to vector<32x128xbf16>
    %c4 = arith.constant 4 : index
    %c0_21 = arith.constant 0 : index
    %c0_22 = arith.constant 0 : index
    %53 = vector.load %arg4[%c4, %c0_21, %c0_22] : memref<5x128x256xbf16, #tpu.memory_space<vmem>>, vector<1x128x256xbf16>
    %54 = vector.shape_cast %53 : vector<1x128x256xbf16> to vector<128x256xbf16>
    %cst_23 = arith.constant dense<0.000000e+00> : vector<32x256xf32>
    %55 = tpu.matmul %52, %54, %cst_23 {dimension_numbers = #tpu.dot_dimension_numbers<[1], [0], [0], [1], [0, 0, 1, 1], [], []>} : vector<32x128xbf16>, vector<128x256xbf16>, vector<32x256xf32> -> vector<32x256xf32>
    %56 = arith.addf %51, %55 : vector<32x256xf32>
    %57 = vector.extract_strided_slice %32 {offsets = [0, 0], sizes = [32, 128], strides = [1, 1]} : vector<48x128xbf16> to vector<32x128xbf16>
    %c0_24 = arith.constant 0 : index
    %c0_25 = arith.constant 0 : index
    %c0_26 = arith.constant 0 : index
    %58 = vector.load %arg4[%c0_24, %c0_25, %c0_26] : memref<5x128x256xbf16, #tpu.memory_space<vmem>>, vector<1x128x256xbf16>
    %59 = vector.shape_cast %58 : vector<1x128x256xbf16> to vector<128x256xbf16>
    %cst_27 = arith.constant dense<0.000000e+00> : vector<32x256xf32>
    %60 = tpu.matmul %57, %59, %cst_27 {dimension_numbers = #tpu.dot_dimension_numbers<[1], [0], [0], [1], [0, 0, 1, 1], [], []>} : vector<32x128xbf16>, vector<128x256xbf16>, vector<32x256xf32> -> vector<32x256xf32>
    %61 = vector.extract_strided_slice %31 {offsets = [8, 0], sizes = [32, 128], strides = [1, 1]} : vector<48x128xbf16> to vector<32x128xbf16>
    %c1_28 = arith.constant 1 : index
    %c0_29 = arith.constant 0 : index
    %c0_30 = arith.constant 0 : index
    %62 = vector.load %arg4[%c1_28, %c0_29, %c0_30] : memref<5x128x256xbf16, #tpu.memory_space<vmem>>, vector<1x128x256xbf16>
    %63 = vector.shape_cast %62 : vector<1x128x256xbf16> to vector<128x256xbf16>
    %cst_31 = arith.constant dense<0.000000e+00> : vector<32x256xf32>
    %64 = tpu.matmul %61, %63, %cst_31 {dimension_numbers = #tpu.dot_dimension_numbers<[1], [0], [0], [1], [0, 0, 1, 1], [], []>} : vector<32x128xbf16>, vector<128x256xbf16>, vector<32x256xf32> -> vector<32x256xf32>
    %65 = arith.addf %60, %64 : vector<32x256xf32>
    %66 = vector.extract_strided_slice %32 {offsets = [8, 0], sizes = [32, 128], strides = [1, 1]} : vector<48x128xbf16> to vector<32x128xbf16>
    %c2_32 = arith.constant 2 : index
    %c0_33 = arith.constant 0 : index
    %c0_34 = arith.constant 0 : index
    %67 = vector.load %arg4[%c2_32, %c0_33, %c0_34] : memref<5x128x256xbf16, #tpu.memory_space<vmem>>, vector<1x128x256xbf16>
    %68 = vector.shape_cast %67 : vector<1x128x256xbf16> to vector<128x256xbf16>
    %cst_35 = arith.constant dense<0.000000e+00> : vector<32x256xf32>
    %69 = tpu.matmul %66, %68, %cst_35 {dimension_numbers = #tpu.dot_dimension_numbers<[1], [0], [0], [1], [0, 0, 1, 1], [], []>} : vector<32x128xbf16>, vector<128x256xbf16>, vector<32x256xf32> -> vector<32x256xf32>
    %70 = arith.addf %65, %69 : vector<32x256xf32>
    %71 = vector.extract_strided_slice %31 {offsets = [16, 0], sizes = [32, 128], strides = [1, 1]} : vector<48x128xbf16> to vector<32x128xbf16>
    %c3_36 = arith.constant 3 : index
    %c0_37 = arith.constant 0 : index
    %c0_38 = arith.constant 0 : index
    %72 = vector.load %arg4[%c3_36, %c0_37, %c0_38] : memref<5x128x256xbf16, #tpu.memory_space<vmem>>, vector<1x128x256xbf16>
    %73 = vector.shape_cast %72 : vector<1x128x256xbf16> to vector<128x256xbf16>
    %cst_39 = arith.constant dense<0.000000e+00> : vector<32x256xf32>
    %74 = tpu.matmul %71, %73, %cst_39 {dimension_numbers = #tpu.dot_dimension_numbers<[1], [0], [0], [1], [0, 0, 1, 1], [], []>} : vector<32x128xbf16>, vector<128x256xbf16>, vector<32x256xf32> -> vector<32x256xf32>
    %75 = arith.addf %70, %74 : vector<32x256xf32>
    %76 = vector.extract_strided_slice %32 {offsets = [16, 0], sizes = [32, 128], strides = [1, 1]} : vector<48x128xbf16> to vector<32x128xbf16>
    %c4_40 = arith.constant 4 : index
    %c0_41 = arith.constant 0 : index
    %c0_42 = arith.constant 0 : index
    %77 = vector.load %arg4[%c4_40, %c0_41, %c0_42] : memref<5x128x256xbf16, #tpu.memory_space<vmem>>, vector<1x128x256xbf16>
    %78 = vector.shape_cast %77 : vector<1x128x256xbf16> to vector<128x256xbf16>
    %cst_43 = arith.constant dense<0.000000e+00> : vector<32x256xf32>
    %79 = tpu.matmul %76, %78, %cst_43 {dimension_numbers = #tpu.dot_dimension_numbers<[1], [0], [0], [1], [0, 0, 1, 1], [], []>} : vector<32x128xbf16>, vector<128x256xbf16>, vector<32x256xf32> -> vector<32x256xf32>
    %80 = arith.addf %75, %79 : vector<32x256xf32>
    %81 = vector.extract_strided_slice %56 {offsets = [0, 0], sizes = [32, 128], strides = [1, 1]} : vector<32x256xf32> to vector<32x128xf32>
    %82 = vector.extract_strided_slice %56 {offsets = [0, 128], sizes = [32, 128], strides = [1, 1]} : vector<32x256xf32> to vector<32x128xf32>
    %83 = arith.maximumf %81, %82 : vector<32x128xf32>
    %84 = vector.extract_strided_slice %80 {offsets = [0, 0], sizes = [32, 128], strides = [1, 1]} : vector<32x256xf32> to vector<32x128xf32>
    %85 = vector.extract_strided_slice %80 {offsets = [0, 128], sizes = [32, 128], strides = [1, 1]} : vector<32x256xf32> to vector<32x128xf32>
    %86 = arith.maximumf %84, %85 : vector<32x128xf32>
    %87 = arith.maximumf %83, %86 : vector<32x128xf32>
    %c0_44 = arith.constant 0 : index
    %c0_45 = arith.constant 0 : index
    %88 = vector.load %arg5[%c0_44, %c0_45] : memref<1x128xf32, #tpu.memory_space<vmem>>, vector<1x128xf32>
    %89 = vector.broadcast %88 : vector<1x128xf32> to vector<32x128xf32>
    %90 = arith.addf %87, %89 : vector<32x128xf32>
    %cst_46 = arith.constant 0.000000e+00 : f32
    %91 = vector.broadcast %cst_46 : f32 to vector<32x128xf32>
    %92 = arith.maximumf %90, %91 : vector<32x128xf32>
    %93 = arith.truncf %92 : vector<32x128xf32> to vector<32x128xbf16>
    %c0_47 = arith.constant 0 : index
    %c0_48 = arith.constant 0 : index
    %94 = vector.load %arg7[%c0_47, %c0_48] : memref<1x50xf32, #tpu.memory_space<vmem>>, vector<1x50xf32>
    %95 = vector.extract_strided_slice %93 {offsets = [0, 0], sizes = [8, 128], strides = [1, 1]} : vector<32x128xbf16> to vector<8x128xbf16>
    %c0_49 = arith.constant 0 : index
    %c0_50 = arith.constant 0 : index
    %c0_51 = arith.constant 0 : index
    %96 = vector.load %arg6[%c0_49, %c0_50, %c0_51] : memref<4x128x50xbf16, #tpu.memory_space<vmem>>, vector<1x128x50xbf16>
    %97 = vector.shape_cast %96 : vector<1x128x50xbf16> to vector<128x50xbf16>
    %cst_52 = arith.constant dense<0.000000e+00> : vector<8x50xf32>
    %98 = tpu.matmul %95, %97, %cst_52 {dimension_numbers = #tpu.dot_dimension_numbers<[1], [0], [0], [1], [0, 0, 1, 1], [], []>} : vector<8x128xbf16>, vector<128x50xbf16>, vector<8x50xf32> -> vector<8x50xf32>
    %99 = vector.broadcast %94 : vector<1x50xf32> to vector<8x50xf32>
    %100 = arith.addf %99, %98 : vector<8x50xf32>
    %101 = vector.extract_strided_slice %93 {offsets = [8, 0], sizes = [8, 128], strides = [1, 1]} : vector<32x128xbf16> to vector<8x128xbf16>
    %c1_53 = arith.constant 1 : index
    %c0_54 = arith.constant 0 : index
    %c0_55 = arith.constant 0 : index
    %102 = vector.load %arg6[%c1_53, %c0_54, %c0_55] : memref<4x128x50xbf16, #tpu.memory_space<vmem>>, vector<1x128x50xbf16>
    %103 = vector.shape_cast %102 : vector<1x128x50xbf16> to vector<128x50xbf16>
    %cst_56 = arith.constant dense<0.000000e+00> : vector<8x50xf32>
    %104 = tpu.matmul %101, %103, %cst_56 {dimension_numbers = #tpu.dot_dimension_numbers<[1], [0], [0], [1], [0, 0, 1, 1], [], []>} : vector<8x128xbf16>, vector<128x50xbf16>, vector<8x50xf32> -> vector<8x50xf32>
    %105 = arith.addf %100, %104 : vector<8x50xf32>
    %106 = vector.extract_strided_slice %93 {offsets = [16, 0], sizes = [8, 128], strides = [1, 1]} : vector<32x128xbf16> to vector<8x128xbf16>
    %c2_57 = arith.constant 2 : index
    %c0_58 = arith.constant 0 : index
    %c0_59 = arith.constant 0 : index
    %107 = vector.load %arg6[%c2_57, %c0_58, %c0_59] : memref<4x128x50xbf16, #tpu.memory_space<vmem>>, vector<1x128x50xbf16>
    %108 = vector.shape_cast %107 : vector<1x128x50xbf16> to vector<128x50xbf16>
    %cst_60 = arith.constant dense<0.000000e+00> : vector<8x50xf32>
    %109 = tpu.matmul %106, %108, %cst_60 {dimension_numbers = #tpu.dot_dimension_numbers<[1], [0], [0], [1], [0, 0, 1, 1], [], []>} : vector<8x128xbf16>, vector<128x50xbf16>, vector<8x50xf32> -> vector<8x50xf32>
    %110 = arith.addf %105, %109 : vector<8x50xf32>
    %111 = vector.extract_strided_slice %93 {offsets = [24, 0], sizes = [8, 128], strides = [1, 1]} : vector<32x128xbf16> to vector<8x128xbf16>
    %c3_61 = arith.constant 3 : index
    %c0_62 = arith.constant 0 : index
    %c0_63 = arith.constant 0 : index
    %112 = vector.load %arg6[%c3_61, %c0_62, %c0_63] : memref<4x128x50xbf16, #tpu.memory_space<vmem>>, vector<1x128x50xbf16>
    %113 = vector.shape_cast %112 : vector<1x128x50xbf16> to vector<128x50xbf16>
    %cst_64 = arith.constant dense<0.000000e+00> : vector<8x50xf32>
    %114 = tpu.matmul %111, %113, %cst_64 {dimension_numbers = #tpu.dot_dimension_numbers<[1], [0], [0], [1], [0, 0, 1, 1], [], []>} : vector<8x128xbf16>, vector<128x50xbf16>, vector<8x50xf32> -> vector<8x50xf32>
    %115 = arith.addf %110, %114 : vector<8x50xf32>
    %cst_65 = arith.constant 0.000000e+00 : f32
    %116 = vector.broadcast %cst_65 : f32 to vector<8x50xf32>
    %117 = arith.maximumf %115, %116 : vector<8x50xf32>
    %118 = arith.truncf %117 : vector<8x50xf32> to vector<8x50xbf16>
    %c0_66 = arith.constant 0 : index
    %c0_67 = arith.constant 0 : index
    %119 = vector.load %arg8[%c0_66, %c0_67] : memref<50x128xbf16, #tpu.memory_space<vmem>>, vector<50x128xbf16>
    %cst_68 = arith.constant dense<0.000000e+00> : vector<8x128xf32>
    %120 = tpu.matmul %118, %119, %cst_68 {dimension_numbers = #tpu.dot_dimension_numbers<[1], [0], [0], [1], [0, 0, 1, 1], [], []>} : vector<8x50xbf16>, vector<50x128xbf16>, vector<8x128xf32> -> vector<8x128xf32>
    %c0_69 = arith.constant 0 : index
    %c0_70 = arith.constant 0 : index
    %121 = vector.load %arg9[%c0_69, %c0_70] : memref<1x128xf32, #tpu.memory_space<vmem>>, vector<1x128xf32>
    %122 = vector.broadcast %121 : vector<1x128xf32> to vector<8x128xf32>
    %123 = arith.addf %120, %122 : vector<8x128xf32>
    %cst_71 = arith.constant dense<0xFF800000> : vector<8xf32>
    %124 = vector.multi_reduction <maximumf>, %123, %cst_71 [1] : vector<8x128xf32> to vector<8xf32>
    %125 = vector.shape_cast %124 : vector<8xf32> to vector<8x1xf32>
    %126 = vector.broadcast %125 : vector<8x1xf32> to vector<8x128xf32>
    %127 = arith.subf %123, %126 : vector<8x128xf32>
    %128 = math.exp %127 : vector<8x128xf32>
    %cst_72 = arith.constant dense<0.000000e+00> : vector<8xf32>
    %129 = vector.multi_reduction <add>, %128, %cst_72 [1] : vector<8x128xf32> to vector<8xf32>
    %130 = vector.shape_cast %129 : vector<8xf32> to vector<8x1xf32>
    %131 = math.log %130 : vector<8x1xf32>
    %132 = vector.broadcast %131 : vector<8x1xf32> to vector<8x128xf32>
    %133 = arith.subf %127, %132 : vector<8x128xf32>
    %c0_73 = arith.constant 0 : index
    %c0_74 = arith.constant 0 : index
    %c0_75 = arith.constant 0 : index
    %134 = vector.load %arg10[%c0_73, %c0_74, %c0_75] : memref<1x8x128xf32, #tpu.memory_space<vmem>>, vector<1x8x128xf32>
    %135 = vector.shape_cast %134 : vector<1x8x128xf32> to vector<8x128xf32>
    %136 = vector.shape_cast %133 : vector<8x128xf32> to vector<1x8x128xf32>
    tpu.vector_store %arg10[%c0_73, %c0_74, %c0_75], %136 {strides = array<i32>} : memref<1x8x128xf32, #tpu.memory_space<vmem>>, vector<1x8x128xf32>,
    return
  }
  func.func @transform_0(%arg0: i32) -> (i32, i32, i32) {
    %c0_i32 = arith.constant 0 : i32
    %c0_i32_0 = arith.constant 0 : i32
    %c0_i32_1 = arith.constant 0 : i32
    return %arg0, %c0_i32, %c0_i32_0 : i32, i32, i32
  }
  func.func @transform_1(%arg0: i32) -> (i32, i32) {
    %c0_i32 = arith.constant 0 : i32
    %c0_i32_0 = arith.constant 0 : i32
    %c0_i32_1 = arith.constant 0 : i32
    return %c0_i32, %c0_i32_0 : i32, i32
  }
  func.func @transform_2(%arg0: i32) -> (i32, i32) {
    %c0_i32 = arith.constant 0 : i32
    %c0_i32_0 = arith.constant 0 : i32
    %c0_i32_1 = arith.constant 0 : i32
    return %c0_i32, %c0_i32_0 : i32, i32
  }
  func.func @transform_3(%arg0: i32) -> (i32, i32, i32) {
    %c0_i32 = arith.constant 0 : i32
    %c0_i32_0 = arith.constant 0 : i32
    %c0_i32_1 = arith.constant 0 : i32
    %c0_i32_2 = arith.constant 0 : i32
    return %c0_i32, %c0_i32_0, %c0_i32_1 : i32, i32, i32
  }
  func.func @transform_4(%arg0: i32) -> (i32, i32) {
    %c0_i32 = arith.constant 0 : i32
    %c0_i32_0 = arith.constant 0 : i32
    %c0_i32_1 = arith.constant 0 : i32
    return %c0_i32, %c0_i32_0 : i32, i32
  }
  func.func @transform_5(%arg0: i32) -> (i32, i32, i32) {
    %c0_i32 = arith.constant 0 : i32
    %c0_i32_0 = arith.constant 0 : i32
    %c0_i32_1 = arith.constant 0 : i32
    %c0_i32_2 = arith.constant 0 : i32
    return %c0_i32, %c0_i32_0, %c0_i32_1 : i32, i32, i32
  }
  func.func @transform_6(%arg0: i32) -> (i32, i32) {
    %c0_i32 = arith.constant 0 : i32
    %c0_i32_0 = arith.constant 0 : i32
    %c0_i32_1 = arith.constant 0 : i32
    return %c0_i32, %c0_i32_0 : i32, i32
  }
  func.func @transform_7(%arg0: i32) -> (i32, i32) {
    %c0_i32 = arith.constant 0 : i32
    %c0_i32_0 = arith.constant 0 : i32
    %c0_i32_1 = arith.constant 0 : i32
    return %c0_i32, %c0_i32_0 : i32, i32
  }
  func.func @transform_8(%arg0: i32) -> (i32, i32) {
    %c0_i32 = arith.constant 0 : i32
    %c0_i32_0 = arith.constant 0 : i32
    %c0_i32_1 = arith.constant 0 : i32
    return %c0_i32, %c0_i32_0 : i32, i32
  }
  func.func @transform_9(%arg0: i32) -> (i32, i32, i32) {
    %c0_i32 = arith.constant 0 : i32
    %c0_i32_0 = arith.constant 0 : i32
    %c0_i32_1 = arith.constant 0 : i32
    return %arg0, %c0_i32, %c0_i32_0 : i32, i32, i32
  }
}

</mosaic_0001>

<llo_original>
// kernel: net_forward.1
$region0: #{net_forward.1}
  #allocation0 [shape = 'u32[]', space=smem, size = 0x4, offset = 0x4, fixed_abs, tag = 'smem constant byte address 0x4 - core index']
  #allocation1 [shape = 'u32[144,128]{1,0:T(1,128)}', space=vmem, size = 0x12000, scoped, tag = 'internal scratch']
  %s0 = inlined_call_operand.vmem [shape: bf16[1,192,140], index: 0, kind: input, shape index: {}]
  %s1 = inlined_call_operand.vmem [shape: bf16[140,256], index: 1, kind: input, shape index: {}]
  %s2 = inlined_call_operand.vmem [shape: f32[1,128], index: 2, kind: input, shape index: {}]
  %s3 = inlined_call_operand.vmem [shape: bf16[5,128,256], index: 3, kind: input, shape index: {}]
  %s4 = inlined_call_operand.vmem [shape: f32[1,128], index: 4, kind: input, shape index: {}]
  %s5 = inlined_call_operand.vmem [shape: bf16[4,128,50], index: 5, kind: input, shape index: {}]
  %s6 = inlined_call_operand.vmem [shape: f32[1,50], index: 6, kind: input, shape index: {}]
  %s7 = inlined_call_operand.vmem [shape: bf16[50,128], index: 7, kind: input, shape index: {}]
  %s8 = inlined_call_operand.vmem [shape: f32[1,128], index: 8, kind: input, shape index: {}]
  %s9 = inlined_call_operand.vmem [shape: f32[1,8,128], index: 9, kind: output, shape index: {}]
  %s10 = sld [smem:[#allocation0]]
  $region46: #{net_forward.1} parent=0
    _
  %s12 = ssub.s32 1, %s10
  %s13 = scalar_select 0, %s12, %s10
  // Predicated region
  $region2: #{net_forward.1} parent=0 // pred_check
    _
  $region3: #{net_forward.1} parent=0 // pred_check_branch
    %15 = sbr.rel (0) target = $region5
  $region4: #{net_forward.1} parent=0 // pred_region
    _
  $region5: #{net_forward.1} parent=0 // pred_fallthru
    _
  // Predicated region
  $region6: #{net_forward.1} parent=0 // pred_check
    _
  $region7: #{net_forward.1} parent=0 // pred_check_branch
    %17 = sbr.rel (0) target = $region9
  $region8: #{net_forward.1} parent=0 // pred_region
    _
  $region9: #{net_forward.1} parent=0 // pred_fallthru
    _
  // Predicated region
  $region10: #{net_forward.1} parent=0 // pred_check
    _
  $region11: #{net_forward.1} parent=0 // pred_check_branch
    %19 = sbr.rel (0) target = $region13
  $region12: #{net_forward.1} parent=0 // pred_region
    _
  $region13: #{net_forward.1} parent=0 // pred_fallthru
    _
  // Predicated region
  $region14: #{net_forward.1} parent=0 // pred_check
    _
  $region15: #{net_forward.1} parent=0 // pred_check_branch
    %21 = sbr.rel (0) target = $region17
  $region16: #{net_forward.1} parent=0 // pred_region
    _
  $region17: #{net_forward.1} parent=0 // pred_fallthru
    _
  // Predicated region
  $region18: #{net_forward.1} parent=0 // pred_check
    _
  $region19: #{net_forward.1} parent=0 // pred_check_branch
    %23 = sbr.rel (0) target = $region21
  $region20: #{net_forward.1} parent=0 // pred_region
    _
  $region21: #{net_forward.1} parent=0 // pred_fallthru
    _
  // Predicated region
  $region22: #{net_forward.1} parent=0 // pred_check
    _
  $region23: #{net_forward.1} parent=0 // pred_check_branch
    %25 = sbr.rel (0) target = $region25
  $region24: #{net_forward.1} parent=0 // pred_region
    _
  $region25: #{net_forward.1} parent=0 // pred_fallthru
    _
  // Predicated region
  $region26: #{net_forward.1} parent=0 // pred_check
    _
  $region27: #{net_forward.1} parent=0 // pred_check_branch
    %27 = sbr.rel (0) target = $region29
  $region28: #{net_forward.1} parent=0 // pred_region
    _
  $region29: #{net_forward.1} parent=0 // pred_fallthru
    _
  // Predicated region
  $region30: #{net_forward.1} parent=0 // pred_check
    _
  $region31: #{net_forward.1} parent=0 // pred_check_branch
    %29 = sbr.rel (0) target = $region33
  $region32: #{net_forward.1} parent=0 // pred_region
    _
  $region33: #{net_forward.1} parent=0 // pred_fallthru
    _
  // Predicated region
  $region34: #{net_forward.1} parent=0 // pred_check
    _
  $region35: #{net_forward.1} parent=0 // pred_check_branch
    %31 = sbr.rel (0) target = $region37
  $region36: #{net_forward.1} parent=0 // pred_region
    _
  $region37: #{net_forward.1} parent=0 // pred_fallthru
    _
  %v33 = vld [vmem:[%s0] sm:$0xff]
  %v34 = vld [vmem:[%s0 + $0x8] sm:$0xff]
  %v35 = vld [vmem:[%s0 + $0x10] sm:$0xff]
  %v36 = vld [vmem:[%s0 + $0x18] sm:$0xff]
  %v37 = vld [vmem:[%s0 + $0x20] sm:$0xff]
  %v38 = vld [vmem:[%s0 + $0x28] sm:$0xff]
  %v39 = vld [vmem:[%s0 + $0x30] sm:$0xff]
  %v40 = vld [vmem:[%s0 + $0x38] sm:$0xff]
  %v41 = vld [vmem:[%s0 + $0x40] sm:$0xff]
  %v42 = vld [vmem:[%s0 + $0x48] sm:$0xff]
  %v43 = vld [vmem:[%s0 + $0x50] sm:$0xff]
  %v44 = vld [vmem:[%s0 + $0x58] sm:$0xff]
  %v45 = vld [vmem:[%s0 + $0x60] sm:$0xff]
  %v46 = vld [vmem:[%s0 + $0x68] sm:$0xff]
  %v47 = vld [vmem:[%s0 + $0x70] sm:$0xff]
  %v48 = vld [vmem:[%s0 + $0x78] sm:$0xff]
  %v49 = vld [vmem:[%s0 + $0x80] sm:$0xff]
  %v50 = vld [vmem:[%s0 + $0x88] sm:$0xff]
  %v51 = vld [vmem:[%s0 + $0x90] sm:$0xff]
  %v52 = vld [vmem:[%s0 + $0x98] sm:$0xff]
  %v53 = vld [vmem:[%s0 + $0xa0] sm:$0xff]
  %v54 = vld [vmem:[%s0 + $0xa8] sm:$0xff]
  %v55 = vld [vmem:[%s0 + $0xb0] sm:$0xff]
  %v56 = vld [vmem:[%s0 + $0xb8] sm:$0xff]
  %v57 = vld [vmem:[%s1] sm:$0xff]
  %v58 = vld [vmem:[%s1 + $0x8] sm:$0xff]
  %v59 = vld [vmem:[%s1 + $0x10] sm:$0xff]
  %v60 = vld [vmem:[%s1 + $0x18] sm:$0xff]
  %v61 = vld [vmem:[%s1 + $0x20] sm:$0xff]
  %v62 = vld [vmem:[%s1 + $0x28] sm:$0xff]
  %v63 = vld [vmem:[%s1 + $0x30] sm:$0xff]
  %v64 = vld [vmem:[%s1 + $0x38] sm:$0xff]
  %v65 = vld [vmem:[%s1 + $0x40] sm:$0xff]
  %v66 = vld [vmem:[%s1 + $0x48] sm:$0xff]
  %v67 = vld [vmem:[%s1 + $0x50] sm:$0xff]
  %v68 = vld [vmem:[%s1 + $0x58] sm:$0xff]
  %v69 = vld [vmem:[%s1 + $0x60] sm:$0xff]
  %v70 = vld [vmem:[%s1 + $0x68] sm:$0xff]
  %v71 = vld [vmem:[%s1 + $0x70] sm:$0xff]
  %v72 = vld [vmem:[%s1 + $0x78] sm:$0xff]
  %v73 = vld [vmem:[%s1 + $0x80] sm:$0xff]
  %v74 = vld [vmem:[%s1 + $0x88] sm:$0x33]
  %v99 = vunpack.c.l.b16 %v33
  %v100 = vunpack.c.h.b16 %v33
  %v101 = vunpack.c.l.b16 %v34
  %v102 = vunpack.c.h.b16 %v34
  %v103 = vunpack.c.l.b16 %v35
  %v104 = vunpack.c.h.b16 %v35
  %v105 = vunpack.c.l.b16 %v36
  %v106 = vunpack.c.h.b16 %v36
  %v107 = vunpack.c.l.b16 %v37
  %v108 = vunpack.c.h.b16 %v37
  %v109 = vunpack.c.l.b16 %v38
  %v110 = vunpack.c.h.b16 %v38
  %v111 = vunpack.c.l.b16 %v39
  %v112 = vunpack.c.h.b16 %v39
  %v113 = vunpack.c.l.b16 %v40
  %v114 = vunpack.c.h.b16 %v40
  %v115 = vunpack.c.l.b16 %v41
  %v116 = vunpack.c.h.b16 %v41
  %v117 = vunpack.c.l.b16 %v42
  %v118 = vunpack.c.h.b16 %v42
  %v119 = vunpack.c.l.b16 %v43
  %v120 = vunpack.c.h.b16 %v43
  %v121 = vunpack.c.l.b16 %v44
  %v122 = vunpack.c.h.b16 %v44
  %v123 = vunpack.c.l.b16 %v45
  %v124 = vunpack.c.h.b16 %v45
  %v125 = vunpack.c.l.b16 %v46
  %v126 = vunpack.c.h.b16 %v46
  %v127 = vunpack.c.l.b16 %v47
  %v128 = vunpack.c.h.b16 %v47
  %v129 = vunpack.c.l.b16 %v48
  %v130 = vunpack.c.h.b16 %v48
  %v131 = vunpack.c.l.b16 %v49
  %v132 = vunpack.c.h.b16 %v49
  %v133 = vunpack.c.l.b16 %v50
  %v134 = vunpack.c.h.b16 %v50
  %v135 = vunpack.c.l.b16 %v51
  %v136 = vunpack.c.h.b16 %v51
  %v137 = vunpack.c.l.b16 %v52
  %v138 = vunpack.c.h.b16 %v52
  %v139 = vunpack.c.l.b16 %v53
  %v140 = vunpack.c.h.b16 %v53
  %v141 = vunpack.c.l.b16 %v54
  %v142 = vunpack.c.h.b16 %v54
  %v143 = vunpack.c.l.b16 %v55
  %v144 = vunpack.c.h.b16 %v55
  %v145 = vunpack.c.l.b16 %v56
  %v146 = vunpack.c.h.b16 %v56
  %v147 = vpack.c.b16 %v101, %v99
  %v148 = vpack.c.b16 %v102, %v100
  %v149 = vpack.c.b16 %v105, %v103
  %v150 = vpack.c.b16 %v106, %v104
  %v151 = vpack.c.b16 %v109, %v107
  %v152 = vpack.c.b16 %v110, %v108
  %v153 = vpack.c.b16 %v113, %v111
  %v154 = vpack.c.b16 %v114, %v112
  %v155 = vpack.c.b16 %v117, %v115
  %v156 = vpack.c.b16 %v118, %v116
  %v157 = vpack.c.b16 %v121, %v119
  %v158 = vpack.c.b16 %v122, %v120
  %v159 = vpack.c.b16 %v125, %v123
  %v160 = vpack.c.b16 %v126, %v124
  %v161 = vpack.c.b16 %v129, %v127
  %v162 = vpack.c.b16 %v130, %v128
  %v163 = vpack.c.b16 %v133, %v131
  %v164 = vpack.c.b16 %v134, %v132
  %v165 = vpack.c.b16 %v137, %v135
  %v166 = vpack.c.b16 %v138, %v136
  %v167 = vpack.c.b16 %v141, %v139
  %v168 = vpack.c.b16 %v142, %v140
  %v169 = vpack.c.b16 %v145, %v143
  %v170 = vpack.c.b16 %v146, %v144
  %v201 = vunpack.c.l.b16 %v57
  %v202 = vunpack.c.h.b16 %v57
  %v203 = vunpack.c.l.b16 %v58
  %v204 = vunpack.c.h.b16 %v58
  %v205 = vunpack.c.l.b16 %v59
  %v206 = vunpack.c.h.b16 %v59
  %v207 = vunpack.c.l.b16 %v60
  %v208 = vunpack.c.h.b16 %v60
  %v209 = vunpack.c.l.b16 %v61
  %v210 = vunpack.c.h.b16 %v61
  %v211 = vunpack.c.l.b16 %v62
  %v212 = vunpack.c.h.b16 %v62
  %v213 = vunpack.c.l.b16 %v63
  %v214 = vunpack.c.h.b16 %v63
  %v215 = vunpack.c.l.b16 %v64
  %v216 = vunpack.c.h.b16 %v64
  %v217 = vunpack.c.l.b16 %v65
  %v218 = vunpack.c.h.b16 %v65
  %v219 = vunpack.c.l.b16 %v66
  %v220 = vunpack.c.h.b16 %v66
  %v221 = vunpack.c.l.b16 %v67
  %v222 = vunpack.c.h.b16 %v67
  %v223 = vunpack.c.l.b16 %v68
  %v224 = vunpack.c.h.b16 %v68
  %v225 = vunpack.c.l.b16 %v69
  %v226 = vunpack.c.h.b16 %v69
  %v227 = vunpack.c.l.b16 %v70
  %v228 = vunpack.c.h.b16 %v70
  %v229 = vunpack.c.l.b16 %v71
  %v230 = vunpack.c.h.b16 %v71
  %v231 = vunpack.c.l.b16 %v72
  %v232 = vunpack.c.h.b16 %v72
  %v233 = vunpack.c.l.b16 %v73
  %v234 = vunpack.c.h.b16 %v73
  %v235 = vunpack.c.l.b16 %v74
  %v236 = vunpack.c.h.b16 %v74
  %v237 = vpack.c.b16 %v203, %v201
  %v238 = vpack.c.b16 %v204, %v202
  %v239 = vpack.c.b16 %v207, %v205
  %v240 = vpack.c.b16 %v208, %v206
  %v241 = vpack.c.b16 %v211, %v209
  %v242 = vpack.c.b16 %v212, %v210
  %v243 = vpack.c.b16 %v215, %v213
  %v244 = vpack.c.b16 %v216, %v214
  %v245 = vpack.c.b16 %v219, %v217
  %v246 = vpack.c.b16 %v220, %v218
  %v247 = vpack.c.b16 %v223, %v221
  %v248 = vpack.c.b16 %v224, %v222
  %v249 = vpack.c.b16 %v227, %v225
  %v250 = vpack.c.b16 %v228, %v226
  %v251 = vpack.c.b16 %v231, %v229
  %v252 = vpack.c.b16 %v232, %v230
  %v253 = vpack.c.b16 %v235, %v233
  %v254 = vpack.c.b16 %v236, %v234
  %vm271 = vcmask 97280
  %v273 = vsel %vm271, %v148, 0
  %v276 = vsel %vm271, %v150, 0
  %v279 = vsel %vm271, %v152, 0
  %v282 = vsel %vm271, %v154, 0
  %v285 = vsel %vm271, %v156, 0
  %v288 = vsel %vm271, %v158, 0
  %v291 = vsel %vm271, %v160, 0
  %v294 = vsel %vm271, %v162, 0
  %v297 = vsel %vm271, %v164, 0
  %v300 = vsel %vm271, %v166, 0
  %v303 = vsel %vm271, %v168, 0
  %v306 = vsel %vm271, %v170, 0
  %vm308 = vcmask 1045504
  %v310 = vsel %vm308, %v253, 0
  %v313 = vsel %vm308, %v254, 0
  %315 = vmatprep.subr.bf16.mxu0 %v252
  %316 = vmatpush1.bf16.msra.mxu0 %v251
  %317 = vmatprep.subr.bf16.mxu0 %v250
  %318 = vmatpush1.bf16.msra.mxu0 %v249
  %319 = vmatprep.subr.bf16.mxu0 %v248
  %320 = vmatpush1.bf16.msra.mxu0 %v247
  %321 = vmatprep.subr.bf16.mxu0 %v246
  %322 = vmatpush1.bf16.msra.mxu0 %v245
  %323 = vmatprep.subr.bf16.mxu0 %v244
  %324 = vmatpush1.bf16.msra.mxu0 %v243
  %325 = vmatprep.subr.bf16.mxu0 %v242
  %326 = vmatpush1.bf16.msra.mxu0 %v241
  %327 = vmatprep.subr.bf16.mxu0 %v240
  %328 = vmatpush1.bf16.msra.mxu0 %v239
  %329 = vmatprep.subr.bf16.mxu0 %v238
  %330 = vmatpush1.bf16.msra.mxu0 %v237
  %331 = vmatprep.subr.bf16.mxu0 0
  %332 = vmatpush2.bf16.msra.mxu0 0
  %333 = vmatprep.subr.bf16.mxu0 0
  %334 = vmatpush2.bf16.msra.mxu0 0
  %335 = vmatprep.subr.bf16.mxu0 0
  %336 = vmatpush2.bf16.msra.mxu0 0
  %337 = vmatprep.subr.bf16.mxu0 0
  %338 = vmatpush2.bf16.msra.mxu0 0
  %339 = vmatprep.subr.bf16.mxu0 0
  %340 = vmatpush2.bf16.msra.mxu0 0
  %341 = vmatprep.subr.bf16.mxu0 0
  %342 = vmatpush2.bf16.msra.mxu0 0
  %343 = vmatprep.subr.bf16.mxu0 0
  %344 = vmatpush2.bf16.msra.mxu0 0
  %345 = vmatprep.subr.bf16.mxu0 %v313
  %346 = vmatpush2.bf16.msra.mxu0 %v310
  %347 = vmatprep.mubr.bf16.mxu0 %v273
  %348 = vmatmul.mubr.bf16.gmra.mxu0 %v147
  %v349 = vpop.f32.mrf.mxu0
  %v350 = vadd.f32 0.0, %v349
  %v351 = vpop.f32.mrf.mxu0
  %v352 = vadd.f32 0.0, %v351
  %v353 = vpop.f32.mrf.mxu0
  %v354 = vadd.f32 0.0, %v353
  %v355 = vpop.f32.mrf.mxu0
  %v356 = vadd.f32 0.0, %v355
  %357 = vmatprep.mubr.bf16.mxu0 %v276
  %358 = vmatmul.mubr.bf16.gmra.mxu0 %v149
  %v359 = vpop.f32.mrf.mxu0
  %v360 = vadd.f32 0.0, %v359
  %v361 = vpop.f32.mrf.mxu0
  %v362 = vadd.f32 0.0, %v361
  %v363 = vpop.f32.mrf.mxu0
  %v364 = vadd.f32 0.0, %v363
  %v365 = vpop.f32.mrf.mxu0
  %v366 = vadd.f32 0.0, %v365
  %367 = vmatprep.mubr.bf16.mxu0 %v279
  %368 = vmatmul.mubr.bf16.gmra.mxu0 %v151
  %v369 = vpop.f32.mrf.mxu0
  %v370 = vadd.f32 0.0, %v369
  %v371 = vpop.f32.mrf.mxu0
  %v372 = vadd.f32 0.0, %v371
  %v373 = vpop.f32.mrf.mxu0
  %v374 = vadd.f32 0.0, %v373
  %v375 = vpop.f32.mrf.mxu0
  %v376 = vadd.f32 0.0, %v375
  %377 = vmatprep.mubr.bf16.mxu0 %v282
  %378 = vmatmul.mubr.bf16.gmra.mxu0 %v153
  %v379 = vpop.f32.mrf.mxu0
  %v380 = vadd.f32 0.0, %v379
  %v381 = vpop.f32.mrf.mxu0
  %v382 = vadd.f32 0.0, %v381
  %v383 = vpop.f32.mrf.mxu0
  %v384 = vadd.f32 0.0, %v383
  %v385 = vpop.f32.mrf.mxu0
  %v386 = vadd.f32 0.0, %v385
  %387 = vmatprep.mubr.bf16.mxu0 %v285
  %388 = vmatmul.mubr.bf16.gmra.mxu0 %v155
  %v389 = vpop.f32.mrf.mxu0
  %v390 = vadd.f32 0.0, %v389
  %v391 = vpop.f32.mrf.mxu0
  %v392 = vadd.f32 0.0, %v391
  %v393 = vpop.f32.mrf.mxu0
  %v394 = vadd.f32 0.0, %v393
  %v395 = vpop.f32.mrf.mxu0
  %v396 = vadd.f32 0.0, %v395
  %397 = vmatprep.mubr.bf16.mxu0 %v288
  %398 = vmatmul.mubr.bf16.gmra.mxu0 %v157
  %v399 = vpop.f32.mrf.mxu0
  %v400 = vadd.f32 0.0, %v399
  %v401 = vpop.f32.mrf.mxu0
  %v402 = vadd.f32 0.0, %v401
  %v403 = vpop.f32.mrf.mxu0
  %v404 = vadd.f32 0.0, %v403
  %v405 = vpop.f32.mrf.mxu0
  %v406 = vadd.f32 0.0, %v405
  %407 = vmatprep.mubr.bf16.mxu0 %v291
  %408 = vmatmul.mubr.bf16.gmra.mxu0 %v159
  %v409 = vpop.f32.mrf.mxu0
  %v410 = vadd.f32 0.0, %v409
  %v411 = vpop.f32.mrf.mxu0
  %v412 = vadd.f32 0.0, %v411
  %v413 = vpop.f32.mrf.mxu0
  %v414 = vadd.f32 0.0, %v413
  %v415 = vpop.f32.mrf.mxu0
  %v416 = vadd.f32 0.0, %v415
  %417 = vmatprep.mubr.bf16.mxu0 %v294
  %418 = vmatmul.mubr.bf16.gmra.mxu0 %v161
  %v419 = vpop.f32.mrf.mxu0
  %v420 = vadd.f32 0.0, %v419
  %v421 = vpop.f32.mrf.mxu0
  %v422 = vadd.f32 0.0, %v421
  %v423 = vpop.f32.mrf.mxu0
  %v424 = vadd.f32 0.0, %v423
  %v425 = vpop.f32.mrf.mxu0
  %v426 = vadd.f32 0.0, %v425
  %427 = vmatprep.mubr.bf16.mxu0 %v297
  %428 = vmatmul.mubr.bf16.gmra.mxu0 %v163
  %v429 = vpop.f32.mrf.mxu0
  %v430 = vadd.f32 0.0, %v429
  %v431 = vpop.f32.mrf.mxu0
  %v432 = vadd.f32 0.0, %v431
  %v433 = vpop.f32.mrf.mxu0
  %v434 = vadd.f32 0.0, %v433
  %v435 = vpop.f32.mrf.mxu0
  %v436 = vadd.f32 0.0, %v435
  %437 = vmatprep.mubr.bf16.mxu0 %v300
  %438 = vmatmul.mubr.bf16.gmra.mxu0 %v165
  %v439 = vpop.f32.mrf.mxu0
  %v440 = vadd.f32 0.0, %v439
  %v441 = vpop.f32.mrf.mxu0
  %v442 = vadd.f32 0.0, %v441
  %v443 = vpop.f32.mrf.mxu0
  %v444 = vadd.f32 0.0, %v443
  %v445 = vpop.f32.mrf.mxu0
  %v446 = vadd.f32 0.0, %v445
  %447 = vmatprep.mubr.bf16.mxu0 %v303
  %448 = vmatmul.mubr.bf16.gmra.mxu0 %v167
  %v449 = vpop.f32.mrf.mxu0
  %v450 = vadd.f32 0.0, %v449
  %v451 = vpop.f32.mrf.mxu0
  %v452 = vadd.f32 0.0, %v451
  %v453 = vpop.f32.mrf.mxu0
  %v454 = vadd.f32 0.0, %v453
  %v455 = vpop.f32.mrf.mxu0
  %v456 = vadd.f32 0.0, %v455
  %457 = vmatprep.mubr.bf16.mxu0 %v306
  %458 = vmatmul.mubr.bf16.gmra.mxu0 %v169
  %v459 = vpop.f32.mrf.mxu0
  %v460 = vadd.f32 0.0, %v459
  %v461 = vpop.f32.mrf.mxu0
  %v462 = vadd.f32 0.0, %v461
  %v463 = vpop.f32.mrf.mxu0
  %v464 = vadd.f32 0.0, %v463
  %v465 = vpop.f32.mrf.mxu0
  %v466 = vadd.f32 0.0, %v465
  %467 = vdwg.mxu0
  %v468 = vld [vmem:[%s2] sm:$0x1]
  %v469 = vmax.f32 %v350, %v352
  %v470 = vmax.f32 %v354, %v356
  %v471 = vmax.f32 %v360, %v362
  %v472 = vmax.f32 %v364, %v366
  %v473 = vmax.f32 %v370, %v372
  %v474 = vmax.f32 %v374, %v376
  %v475 = vmax.f32 %v380, %v382
  %v476 = vmax.f32 %v384, %v386
  %v477 = vmax.f32 %v390, %v392
  %v478 = vmax.f32 %v394, %v396
  %v479 = vmax.f32 %v400, %v402
  %v480 = vmax.f32 %v404, %v406
  %v481 = vmax.f32 %v469, %v475
  %v482 = vmax.f32 %v470, %v476
  %v483 = vmax.f32 %v471, %v477
  %v484 = vmax.f32 %v472, %v478
  %v485 = vmax.f32 %v473, %v479
  %v486 = vmax.f32 %v474, %v480
  %v488 = vlaneseq
  %v489 = vshrl.u32 %v488, 7
  %v490 = vsub.s32 0, %v489
  %v491 = vrot.slane %v468, %v490
  %v493 = vadd.f32 %v481, %v491
  %v494 = vadd.f32 %v482, %v491
  %v495 = vadd.f32 %v483, %v491
  %v496 = vadd.f32 %v484, %v491
  %v497 = vadd.f32 %v485, %v491
  %v498 = vadd.f32 %v486, %v491
  %v499 = vmax.f32 %v493, 0.0
  %v500 = vmax.f32 %v494, 0.0
  %v501 = vmax.f32 %v495, 0.0
  %v502 = vmax.f32 %v496, 0.0
  %v503 = vmax.f32 %v497, 0.0
  %v504 = vmax.f32 %v498, 0.0
  %v505 = vmax.f32 %v410, %v412
  %v506 = vmax.f32 %v414, %v416
  %v507 = vmax.f32 %v420, %v422
  %v508 = vmax.f32 %v424, %v426
  %v509 = vmax.f32 %v430, %v432
  %v510 = vmax.f32 %v434, %v436
  %v511 = vmax.f32 %v440, %v442
  %v512 = vmax.f32 %v444, %v446
  %v513 = vmax.f32 %v450, %v452
  %v514 = vmax.f32 %v454, %v456
  %v515 = vmax.f32 %v460, %v462
  %v516 = vmax.f32 %v464, %v466
  %v517 = vmax.f32 %v505, %v511
  %v518 = vmax.f32 %v506, %v512
  %v519 = vmax.f32 %v507, %v513
  %v520 = vmax.f32 %v508, %v514
  %v521 = vmax.f32 %v509, %v515
  %v522 = vmax.f32 %v510, %v516
  %v523 = vadd.f32 %v517, %v491
  %v524 = vadd.f32 %v518, %v491
  %v525 = vadd.f32 %v519, %v491
  %v526 = vadd.f32 %v520, %v491
  %v527 = vadd.f32 %v521, %v491
  %v528 = vadd.f32 %v522, %v491
  %v529 = vmax.f32 %v523, 0.0
  %v530 = vmax.f32 %v524, 0.0
  %v531 = vmax.f32 %v525, 0.0
  %v532 = vmax.f32 %v526, 0.0
  %v533 = vmax.f32 %v527, 0.0
  %v534 = vmax.f32 %v528, 0.0
  %v535 = vpack.c.bf16 %v500, %v499
  %v536 = vpack.c.bf16 %v502, %v501
  %v537 = vpack.c.bf16 %v504, %v503
  %v538 = vpack.c.bf16 %v530, %v529
  %v539 = vpack.c.bf16 %v532, %v531
  %v540 = vpack.c.bf16 %v534, %v533
  %v541 = vld [vmem:[%s3] sm:$0xff]
  %v542 = vld [vmem:[%s3 + $0x8] sm:$0xff]
  %v543 = vld [vmem:[%s3 + $0x10] sm:$0xff]
  %v544 = vld [vmem:[%s3 + $0x18] sm:$0xff]
  %v545 = vld [vmem:[%s3 + $0x20] sm:$0xff]
  %v546 = vld [vmem:[%s3 + $0x28] sm:$0xff]
  %v547 = vld [vmem:[%s3 + $0x30] sm:$0xff]
  %v548 = vld [vmem:[%s3 + $0x38] sm:$0xff]
  %v549 = vld [vmem:[%s3 + $0x40] sm:$0xff]
  %v550 = vld [vmem:[%s3 + $0x48] sm:$0xff]
  %v551 = vld [vmem:[%s3 + $0x50] sm:$0xff]
  %v552 = vld [vmem:[%s3 + $0x58] sm:$0xff]
  %v553 = vld [vmem:[%s3 + $0x60] sm:$0xff]
  %v554 = vld [vmem:[%s3 + $0x68] sm:$0xff]
  %v555 = vld [vmem:[%s3 + $0x70] sm:$0xff]
  %v556 = vld [vmem:[%s3 + $0x78] sm:$0xff]
  %s557 = scalar_lea.vmem %s3, 128
  %v558 = vld [vmem:[%s557] sm:$0xff]
  %v559 = vld [vmem:[%s557 + $0x8] sm:$0xff]
  %v560 = vld [vmem:[%s557 + $0x10] sm:$0xff]
  %v561 = vld [vmem:[%s557 + $0x18] sm:$0xff]
  %v562 = vld [vmem:[%s557 + $0x20] sm:$0xff]
  %v563 = vld [vmem:[%s557 + $0x28] sm:$0xff]
  %v564 = vld [vmem:[%s557 + $0x30] sm:$0xff]
  %v565 = vld [vmem:[%s557 + $0x38] sm:$0xff]
  %v566 = vld [vmem:[%s557 + $0x40] sm:$0xff]
  %v567 = vld [vmem:[%s557 + $0x48] sm:$0xff]
  %v568 = vld [vmem:[%s557 + $0x50] sm:$0xff]
  %v569 = vld [vmem:[%s557 + $0x58] sm:$0xff]
  %v570 = vld [vmem:[%s557 + $0x60] sm:$0xff]
  %v571 = vld [vmem:[%s557 + $0x68] sm:$0xff]
  %v572 = vld [vmem:[%s557 + $0x70] sm:$0xff]
  %v573 = vld [vmem:[%s557 + $0x78] sm:$0xff]
  %v590 = vunpack.c.l.b16 %v558
  %v591 = vunpack.c.h.b16 %v558
  %v592 = vunpack.c.l.b16 %v559
  %v593 = vunpack.c.h.b16 %v559
  %v594 = vunpack.c.l.b16 %v560
  %v595 = vunpack.c.h.b16 %v560
  %v596 = vunpack.c.l.b16 %v561
  %v597 = vunpack.c.h.b16 %v561
  %v598 = vunpack.c.l.b16 %v562
  %v599 = vunpack.c.h.b16 %v562
  %v600 = vunpack.c.l.b16 %v563
  %v601 = vunpack.c.h.b16 %v563
  %v602 = vunpack.c.l.b16 %v564
  %v603 = vunpack.c.h.b16 %v564
  %v604 = vunpack.c.l.b16 %v565
  %v605 = vunpack.c.h.b16 %v565
  %v606 = vunpack.c.l.b16 %v566
  %v607 = vunpack.c.h.b16 %v566
  %v608 = vunpack.c.l.b16 %v567
  %v609 = vunpack.c.h.b16 %v567
  %v610 = vunpack.c.l.b16 %v568
  %v611 = vunpack.c.h.b16 %v568
  %v612 = vunpack.c.l.b16 %v569
  %v613 = vunpack.c.h.b16 %v569
  %v614 = vunpack.c.l.b16 %v570
  %v615 = vunpack.c.h.b16 %v570
  %v616 = vunpack.c.l.b16 %v571
  %v617 = vunpack.c.h.b16 %v571
  %v618 = vunpack.c.l.b16 %v572
  %v619 = vunpack.c.h.b16 %v572
  %v620 = vunpack.c.l.b16 %v573
  %v621 = vunpack.c.h.b16 %v573
  %v622 = vpack.c.b16 %v592, %v590
  %v623 = vpack.c.b16 %v593, %v591
  %v624 = vpack.c.b16 %v596, %v594
  %v625 = vpack.c.b16 %v597, %v595
  %v626 = vpack.c.b16 %v600, %v598
  %v627 = vpack.c.b16 %v601, %v599
  %v628 = vpack.c.b16 %v604, %v602
  %v629 = vpack.c.b16 %v605, %v603
  %v630 = vpack.c.b16 %v608, %v606
  %v631 = vpack.c.b16 %v609, %v607
  %v632 = vpack.c.b16 %v612, %v610
  %v633 = vpack.c.b16 %v613, %v611
  %v634 = vpack.c.b16 %v616, %v614
  %v635 = vpack.c.b16 %v617, %v615
  %v636 = vpack.c.b16 %v620, %v618
  %v637 = vpack.c.b16 %v621, %v619
  %654 = vmatprep.subr.bf16.mxu0 %v637
  %655 = vmatpush1.bf16.msra.mxu0 %v636
  %656 = vmatprep.subr.bf16.mxu0 %v635
  %657 = vmatpush1.bf16.msra.mxu0 %v634
  %658 = vmatprep.subr.bf16.mxu0 %v633
  %659 = vmatpush1.bf16.msra.mxu0 %v632
  %660 = vmatprep.subr.bf16.mxu0 %v631
  %661 = vmatpush1.bf16.msra.mxu0 %v630
  %662 = vmatprep.subr.bf16.mxu0 %v629
  %663 = vmatpush1.bf16.msra.mxu0 %v628
  %664 = vmatprep.subr.bf16.mxu0 %v627
  %665 = vmatpush1.bf16.msra.mxu0 %v626
  %666 = vmatprep.subr.bf16.mxu0 %v625
  %667 = vmatpush1.bf16.msra.mxu0 %v624
  %668 = vmatprep.subr.bf16.mxu0 %v623
  %669 = vmatpush1.bf16.msra.mxu0 %v622
  %670 = vmatprep.subr.bf16.mxu0 0
  %671 = vmatpush2.bf16.msra.mxu0 0
  %672 = vmatprep.subr.bf16.mxu0 0
  %673 = vmatpush2.bf16.msra.mxu0 0
  %674 = vmatprep.subr.bf16.mxu0 0
  %675 = vmatpush2.bf16.msra.mxu0 0
  %676 = vmatprep.subr.bf16.mxu0 0
  %677 = vmatpush2.bf16.msra.mxu0 0
  %678 = vmatprep.subr.bf16.mxu0 0
  %679 = vmatpush2.bf16.msra.mxu0 0
  %680 = vmatprep.subr.bf16.mxu0 0
  %681 = vmatpush2.bf16.msra.mxu0 0
  %682 = vmatprep.subr.bf16.mxu0 0
  %683 = vmatpush2.bf16.msra.mxu0 0
  %684 = vmatprep.subr.bf16.mxu0 0
  %685 = vmatpush2.bf16.msra.mxu0 0
  %686 = vmatprep.mubr.bf16.mxu0 0
  %687 = vmatmul.mubr.bf16.gmra.mxu0 %v538
  %v688 = vpop.f32.mrf.mxu0
  %v689 = vadd.f32 0.0, %v688
  %v690 = vpop.f32.mrf.mxu0
  %v691 = vadd.f32 0.0, %v690
  %v692 = vpop.f32.mrf.mxu0
  %v693 = vadd.f32 0.0, %v692
  %v694 = vpop.f32.mrf.mxu0
  %v695 = vadd.f32 0.0, %v694
  %696 = vmatprep.mubr.bf16.mxu0 0
  %697 = vmatmul.mubr.bf16.gmra.mxu0 %v539
  %v698 = vpop.f32.mrf.mxu0
  %v699 = vadd.f32 0.0, %v698
  %v700 = vpop.f32.mrf.mxu0
  %v701 = vadd.f32 0.0, %v700
  %v702 = vpop.f32.mrf.mxu0
  %v703 = vadd.f32 0.0, %v702
  %v704 = vpop.f32.mrf.mxu0
  %v705 = vadd.f32 0.0, %v704
  %706 = vdwg.mxu0
  %v723 = vunpack.c.l.b16 %v541
  %v724 = vunpack.c.h.b16 %v541
  %v725 = vunpack.c.l.b16 %v542
  %v726 = vunpack.c.h.b16 %v542
  %v727 = vunpack.c.l.b16 %v543
  %v728 = vunpack.c.h.b16 %v543
  %v729 = vunpack.c.l.b16 %v544
  %v730 = vunpack.c.h.b16 %v544
  %v731 = vunpack.c.l.b16 %v545
  %v732 = vunpack.c.h.b16 %v545
  %v733 = vunpack.c.l.b16 %v546
  %v734 = vunpack.c.h.b16 %v546
  %v735 = vunpack.c.l.b16 %v547
  %v736 = vunpack.c.h.b16 %v547
  %v737 = vunpack.c.l.b16 %v548
  %v738 = vunpack.c.h.b16 %v548
  %v739 = vunpack.c.l.b16 %v549
  %v740 = vunpack.c.h.b16 %v549
  %v741 = vunpack.c.l.b16 %v550
  %v742 = vunpack.c.h.b16 %v550
  %v743 = vunpack.c.l.b16 %v551
  %v744 = vunpack.c.h.b16 %v551
  %v745 = vunpack.c.l.b16 %v552
  %v746 = vunpack.c.h.b16 %v552
  %v747 = vunpack.c.l.b16 %v553
  %v748 = vunpack.c.h.b16 %v553
  %v749 = vunpack.c.l.b16 %v554
  %v750 = vunpack.c.h.b16 %v554
  %v751 = vunpack.c.l.b16 %v555
  %v752 = vunpack.c.h.b16 %v555
  %v753 = vunpack.c.l.b16 %v556
  %v754 = vunpack.c.h.b16 %v556
  %v755 = vpack.c.b16 %v725, %v723
  %v756 = vpack.c.b16 %v726, %v724
  %v757 = vpack.c.b16 %v729, %v727
  %v758 = vpack.c.b16 %v730, %v728
  %v759 = vpack.c.b16 %v733, %v731
  %v760 = vpack.c.b16 %v734, %v732
  %v761 = vpack.c.b16 %v737, %v735
  %v762 = vpack.c.b16 %v738, %v736
  %v763 = vpack.c.b16 %v741, %v739
  %v764 = vpack.c.b16 %v742, %v740
  %v765 = vpack.c.b16 %v745, %v743
  %v766 = vpack.c.b16 %v746, %v744
  %v767 = vpack.c.b16 %v749, %v747
  %v768 = vpack.c.b16 %v750, %v748
  %v769 = vpack.c.b16 %v753, %v751
  %v770 = vpack.c.b16 %v754, %v752
  %787 = vmatprep.subr.bf16.mxu0 %v770
  %788 = vmatpush1.bf16.msra.mxu0 %v769
  %789 = vmatprep.subr.bf16.mxu0 %v768
  %790 = vmatpush1.bf16.msra.mxu0 %v767
  %791 = vmatprep.subr.bf16.mxu0 %v766
  %792 = vmatpush1.bf16.msra.mxu0 %v765
  %793 = vmatprep.subr.bf16.mxu0 %v764
  %794 = vmatpush1.bf16.msra.mxu0 %v763
  %795 = vmatprep.subr.bf16.mxu0 %v762
  %796 = vmatpush1.bf16.msra.mxu0 %v761
  %797 = vmatprep.subr.bf16.mxu0 %v760
  %798 = vmatpush1.bf16.msra.mxu0 %v759
  %799 = vmatprep.subr.bf16.mxu0 %v758
  %800 = vmatpush1.bf16.msra.mxu0 %v757
  %801 = vmatprep.subr.bf16.mxu0 %v756
  %802 = vmatpush1.bf16.msra.mxu0 %v755
  %803 = vmatprep.subr.bf16.mxu0 0
  %804 = vmatpush2.bf16.msra.mxu0 0
  %805 = vmatprep.subr.bf16.mxu0 0
  %806 = vmatpush2.bf16.msra.mxu0 0
  %807 = vmatprep.subr.bf16.mxu0 0
  %808 = vmatpush2.bf16.msra.mxu0 0
  %809 = vmatprep.subr.bf16.mxu0 0
  %810 = vmatpush2.bf16.msra.mxu0 0
  %811 = vmatprep.subr.bf16.mxu0 0
  %812 = vmatpush2.bf16.msra.mxu0 0
  %813 = vmatprep.subr.bf16.mxu0 0
  %814 = vmatpush2.bf16.msra.mxu0 0
  %815 = vmatprep.subr.bf16.mxu0 0
  %816 = vmatpush2.bf16.msra.mxu0 0
  %817 = vmatprep.subr.bf16.mxu0 0
  %818 = vmatpush2.bf16.msra.mxu0 0
  %819 = vmatprep.mubr.bf16.mxu0 0
  %820 = vmatmul.mubr.bf16.gmra.mxu0 %v535
  %v821 = vpop.f32.mrf.mxu0
  %v822 = vadd.f32 %v689, %v821
  %v823 = vpop.f32.mrf.mxu0
  %v824 = vadd.f32 %v691, %v823
  %v825 = vpop.f32.mrf.mxu0
  %v826 = vadd.f32 %v693, %v825
  %v827 = vpop.f32.mrf.mxu0
  %v828 = vadd.f32 %v695, %v827
  %829 = vmatprep.mubr.bf16.mxu0 0
  %830 = vmatmul.mubr.bf16.gmra.mxu0 %v536
  %v831 = vpop.f32.mrf.mxu0
  %v832 = vadd.f32 %v699, %v831
  %v833 = vpop.f32.mrf.mxu0
  %v834 = vadd.f32 %v701, %v833
  %v835 = vpop.f32.mrf.mxu0
  %v836 = vadd.f32 %v703, %v835
  %v837 = vpop.f32.mrf.mxu0
  %v838 = vadd.f32 %v705, %v837
  %839 = vdwg.mxu0
  %s840 = scalar_lea.vmem %s3, 256
  %v841 = vld [vmem:[%s840] sm:$0xff]
  %v842 = vld [vmem:[%s840 + $0x8] sm:$0xff]
  %v843 = vld [vmem:[%s840 + $0x10] sm:$0xff]
  %v844 = vld [vmem:[%s840 + $0x18] sm:$0xff]
  %v845 = vld [vmem:[%s840 + $0x20] sm:$0xff]
  %v846 = vld [vmem:[%s840 + $0x28] sm:$0xff]
  %v847 = vld [vmem:[%s840 + $0x30] sm:$0xff]
  %v848 = vld [vmem:[%s840 + $0x38] sm:$0xff]
  %v849 = vld [vmem:[%s840 + $0x40] sm:$0xff]
  %v850 = vld [vmem:[%s840 + $0x48] sm:$0xff]
  %v851 = vld [vmem:[%s840 + $0x50] sm:$0xff]
  %v852 = vld [vmem:[%s840 + $0x58] sm:$0xff]
  %v853 = vld [vmem:[%s840 + $0x60] sm:$0xff]
  %v854 = vld [vmem:[%s840 + $0x68] sm:$0xff]
  %v855 = vld [vmem:[%s840 + $0x70] sm:$0xff]
  %v856 = vld [vmem:[%s840 + $0x78] sm:$0xff]
  %vm860 = vcmask 1043456
  %v861 = vrot.slane %v535, 4
  %v862 = vrot.slane %v536, 4
  %v863 = vsel %vm860, %v861, %v862
  %v864 = vrot.slane %v537, 4
  %v865 = vsel %vm860, %v862, %v864
  %v884 = vunpack.c.l.b16 %v841
  %v885 = vunpack.c.h.b16 %v841
  %v886 = vunpack.c.l.b16 %v842
  %v887 = vunpack.c.h.b16 %v842
  %v888 = vunpack.c.l.b16 %v843
  %v889 = vunpack.c.h.b16 %v843
  %v890 = vunpack.c.l.b16 %v844
  %v891 = vunpack.c.h.b16 %v844
  %v892 = vunpack.c.l.b16 %v845
  %v893 = vunpack.c.h.b16 %v845
  %v894 = vunpack.c.l.b16 %v846
  %v895 = vunpack.c.h.b16 %v846
  %v896 = vunpack.c.l.b16 %v847
  %v897 = vunpack.c.h.b16 %v847
  %v898 = vunpack.c.l.b16 %v848
  %v899 = vunpack.c.h.b16 %v848
  %v900 = vunpack.c.l.b16 %v849
  %v901 = vunpack.c.h.b16 %v849
  %v902 = vunpack.c.l.b16 %v850
  %v903 = vunpack.c.h.b16 %v850
  %v904 = vunpack.c.l.b16 %v851
  %v905 = vunpack.c.h.b16 %v851
  %v906 = vunpack.c.l.b16 %v852
  %v907 = vunpack.c.h.b16 %v852
  %v908 = vunpack.c.l.b16 %v853
  %v909 = vunpack.c.h.b16 %v853
  %v910 = vunpack.c.l.b16 %v854
  %v911 = vunpack.c.h.b16 %v854
  %v912 = vunpack.c.l.b16 %v855
  %v913 = vunpack.c.h.b16 %v855
  %v914 = vunpack.c.l.b16 %v856
  %v915 = vunpack.c.h.b16 %v856
  %v916 = vpack.c.b16 %v886, %v884
  %v917 = vpack.c.b16 %v887, %v885
  %v918 = vpack.c.b16 %v890, %v888
  %v919 = vpack.c.b16 %v891, %v889
  %v920 = vpack.c.b16 %v894, %v892
  %v921 = vpack.c.b16 %v895, %v893
  %v922 = vpack.c.b16 %v898, %v896
  %v923 = vpack.c.b16 %v899, %v897
  %v924 = vpack.c.b16 %v902, %v900
  %v925 = vpack.c.b16 %v903, %v901
  %v926 = vpack.c.b16 %v906, %v904
  %v927 = vpack.c.b16 %v907, %v905
  %v928 = vpack.c.b16 %v910, %v908
  %v929 = vpack.c.b16 %v911, %v909
  %v930 = vpack.c.b16 %v914, %v912
  %v931 = vpack.c.b16 %v915, %v913
  %948 = vmatprep.subr.bf16.mxu0 %v931
  %949 = vmatpush1.bf16.msra.mxu0 %v930
  %950 = vmatprep.subr.bf16.mxu0 %v929
  %951 = vmatpush1.bf16.msra.mxu0 %v928
  %952 = vmatprep.subr.bf16.mxu0 %v927
  %953 = vmatpush1.bf16.msra.mxu0 %v926
  %954 = vmatprep.subr.bf16.mxu0 %v925
  %955 = vmatpush1.bf16.msra.mxu0 %v924
  %956 = vmatprep.subr.bf16.mxu0 %v923
  %957 = vmatpush1.bf16.msra.mxu0 %v922
  %958 = vmatprep.subr.bf16.mxu0 %v921
  %959 = vmatpush1.bf16.msra.mxu0 %v920
  %960 = vmatprep.subr.bf16.mxu0 %v919
  %961 = vmatpush1.bf16.msra.mxu0 %v918
  %962 = vmatprep.subr.bf16.mxu0 %v917
  %963 = vmatpush1.bf16.msra.mxu0 %v916
  %964 = vmatprep.subr.bf16.mxu0 0
  %965 = vmatpush2.bf16.msra.mxu0 0
  %966 = vmatprep.subr.bf16.mxu0 0
  %967 = vmatpush2.bf16.msra.mxu0 0
  %968 = vmatprep.subr.bf16.mxu0 0
  %969 = vmatpush2.bf16.msra.mxu0 0
  %970 = vmatprep.subr.bf16.mxu0 0
  %971 = vmatpush2.bf16.msra.mxu0 0
  %972 = vmatprep.subr.bf16.mxu0 0
  %973 = vmatpush2.bf16.msra.mxu0 0
  %974 = vmatprep.subr.bf16.mxu0 0
  %975 = vmatpush2.bf16.msra.mxu0 0
  %976 = vmatprep.subr.bf16.mxu0 0
  %977 = vmatpush2.bf16.msra.mxu0 0
  %978 = vmatprep.subr.bf16.mxu0 0
  %979 = vmatpush2.bf16.msra.mxu0 0
  %980 = vmatprep.mubr.bf16.mxu0 0
  %981 = vmatmul.mubr.bf16.gmra.mxu0 %v863
  %v982 = vpop.f32.mrf.mxu0
  %v983 = vadd.f32 0.0, %v982
  %v984 = vpop.f32.mrf.mxu0
  %v985 = vadd.f32 0.0, %v984
  %v986 = vpop.f32.mrf.mxu0
  %v987 = vadd.f32 0.0, %v986
  %v988 = vpop.f32.mrf.mxu0
  %v989 = vadd.f32 0.0, %v988
  %990 = vmatprep.mubr.bf16.mxu0 0
  %991 = vmatmul.mubr.bf16.gmra.mxu0 %v865
  %v992 = vpop.f32.mrf.mxu0
  %v993 = vadd.f32 0.0, %v992
  %v994 = vpop.f32.mrf.mxu0
  %v995 = vadd.f32 0.0, %v994
  %v996 = vpop.f32.mrf.mxu0
  %v997 = vadd.f32 0.0, %v996
  %v998 = vpop.f32.mrf.mxu0
  %v999 = vadd.f32 0.0, %v998
  %1000 = vdwg.mxu0
  %v1001 = vadd.f32 %v822, %v983
  %v1002 = vadd.f32 %v824, %v985
  %v1003 = vadd.f32 %v826, %v987
  %v1004 = vadd.f32 %v828, %v989
  %v1005 = vadd.f32 %v832, %v993
  %v1006 = vadd.f32 %v834, %v995
  %v1007 = vadd.f32 %v836, %v997
  %v1008 = vadd.f32 %v838, %v999
  %s1009 = scalar_lea.vmem %s3, 384
  %v1010 = vld [vmem:[%s1009] sm:$0xff]
  %v1011 = vld [vmem:[%s1009 + $0x8] sm:$0xff]
  %v1012 = vld [vmem:[%s1009 + $0x10] sm:$0xff]
  %v1013 = vld [vmem:[%s1009 + $0x18] sm:$0xff]
  %v1014 = vld [vmem:[%s1009 + $0x20] sm:$0xff]
  %v1015 = vld [vmem:[%s1009 + $0x28] sm:$0xff]
  %v1016 = vld [vmem:[%s1009 + $0x30] sm:$0xff]
  %v1017 = vld [vmem:[%s1009 + $0x38] sm:$0xff]
  %v1018 = vld [vmem:[%s1009 + $0x40] sm:$0xff]
  %v1019 = vld [vmem:[%s1009 + $0x48] sm:$0xff]
  %v1020 = vld [vmem:[%s1009 + $0x50] sm:$0xff]
  %v1021 = vld [vmem:[%s1009 + $0x58] sm:$0xff]
  %v1022 = vld [vmem:[%s1009 + $0x60] sm:$0xff]
  %v1023 = vld [vmem:[%s1009 + $0x68] sm:$0xff]
  %v1024 = vld [vmem:[%s1009 + $0x70] sm:$0xff]
  %v1025 = vld [vmem:[%s1009 + $0x78] sm:$0xff]
  %v1029 = vrot.slane %v538, 4
  %v1030 = vrot.slane %v539, 4
  %v1031 = vsel %vm860, %v1029, %v1030
  %v1032 = vrot.slane %v540, 4
  %v1033 = vsel %vm860, %v1030, %v1032
  %v1052 = vunpack.c.l.b16 %v1010
  %v1053 = vunpack.c.h.b16 %v1010
  %v1054 = vunpack.c.l.b16 %v1011
  %v1055 = vunpack.c.h.b16 %v1011
  %v1056 = vunpack.c.l.b16 %v1012
  %v1057 = vunpack.c.h.b16 %v1012
  %v1058 = vunpack.c.l.b16 %v1013
  %v1059 = vunpack.c.h.b16 %v1013
  %v1060 = vunpack.c.l.b16 %v1014
  %v1061 = vunpack.c.h.b16 %v1014
  %v1062 = vunpack.c.l.b16 %v1015
  %v1063 = vunpack.c.h.b16 %v1015
  %v1064 = vunpack.c.l.b16 %v1016
  %v1065 = vunpack.c.h.b16 %v1016
  %v1066 = vunpack.c.l.b16 %v1017
  %v1067 = vunpack.c.h.b16 %v1017
  %v1068 = vunpack.c.l.b16 %v1018
  %v1069 = vunpack.c.h.b16 %v1018
  %v1070 = vunpack.c.l.b16 %v1019
  %v1071 = vunpack.c.h.b16 %v1019
  %v1072 = vunpack.c.l.b16 %v1020
  %v1073 = vunpack.c.h.b16 %v1020
  %v1074 = vunpack.c.l.b16 %v1021
  %v1075 = vunpack.c.h.b16 %v1021
  %v1076 = vunpack.c.l.b16 %v1022
  %v1077 = vunpack.c.h.b16 %v1022
  %v1078 = vunpack.c.l.b16 %v1023
  %v1079 = vunpack.c.h.b16 %v1023
  %v1080 = vunpack.c.l.b16 %v1024
  %v1081 = vunpack.c.h.b16 %v1024
  %v1082 = vunpack.c.l.b16 %v1025
  %v1083 = vunpack.c.h.b16 %v1025
  %v1084 = vpack.c.b16 %v1054, %v1052
  %v1085 = vpack.c.b16 %v1055, %v1053
  %v1086 = vpack.c.b16 %v1058, %v1056
  %v1087 = vpack.c.b16 %v1059, %v1057
  %v1088 = vpack.c.b16 %v1062, %v1060
  %v1089 = vpack.c.b16 %v1063, %v1061
  %v1090 = vpack.c.b16 %v1066, %v1064
  %v1091 = vpack.c.b16 %v1067, %v1065
  %v1092 = vpack.c.b16 %v1070, %v1068
  %v1093 = vpack.c.b16 %v1071, %v1069
  %v1094 = vpack.c.b16 %v1074, %v1072
  %v1095 = vpack.c.b16 %v1075, %v1073
  %v1096 = vpack.c.b16 %v1078, %v1076
  %v1097 = vpack.c.b16 %v1079, %v1077
  %v1098 = vpack.c.b16 %v1082, %v1080
  %v1099 = vpack.c.b16 %v1083, %v1081
  %1116 = vmatprep.subr.bf16.mxu0 %v1099
  %1117 = vmatpush1.bf16.msra.mxu0 %v1098
  %1118 = vmatprep.subr.bf16.mxu0 %v1097
  %1119 = vmatpush1.bf16.msra.mxu0 %v1096
  %1120 = vmatprep.subr.bf16.mxu0 %v1095
  %1121 = vmatpush1.bf16.msra.mxu0 %v1094
  %1122 = vmatprep.subr.bf16.mxu0 %v1093
  %1123 = vmatpush1.bf16.msra.mxu0 %v1092
  %1124 = vmatprep.subr.bf16.mxu0 %v1091
  %1125 = vmatpush1.bf16.msra.mxu0 %v1090
  %1126 = vmatprep.subr.bf16.mxu0 %v1089
  %1127 = vmatpush1.bf16.msra.mxu0 %v1088
  %1128 = vmatprep.subr.bf16.mxu0 %v1087
  %1129 = vmatpush1.bf16.msra.mxu0 %v1086
  %1130 = vmatprep.subr.bf16.mxu0 %v1085
  %1131 = vmatpush1.bf16.msra.mxu0 %v1084
  %1132 = vmatprep.subr.bf16.mxu0 0
  %1133 = vmatpush2.bf16.msra.mxu0 0
  %1134 = vmatprep.subr.bf16.mxu0 0
  %1135 = vmatpush2.bf16.msra.mxu0 0
  %1136 = vmatprep.subr.bf16.mxu0 0
  %1137 = vmatpush2.bf16.msra.mxu0 0
  %1138 = vmatprep.subr.bf16.mxu0 0
  %1139 = vmatpush2.bf16.msra.mxu0 0
  %1140 = vmatprep.subr.bf16.mxu0 0
  %1141 = vmatpush2.bf16.msra.mxu0 0
  %1142 = vmatprep.subr.bf16.mxu0 0
  %1143 = vmatpush2.bf16.msra.mxu0 0
  %1144 = vmatprep.subr.bf16.mxu0 0
  %1145 = vmatpush2.bf16.msra.mxu0 0
  %1146 = vmatprep.subr.bf16.mxu0 0
  %1147 = vmatpush2.bf16.msra.mxu0 0
  %1148 = vmatprep.mubr.bf16.mxu0 0
  %1149 = vmatmul.mubr.bf16.gmra.mxu0 %v1031
  %v1150 = vpop.f32.mrf.mxu0
  %v1151 = vadd.f32 0.0, %v1150
  %v1152 = vpop.f32.mrf.mxu0
  %v1153 = vadd.f32 0.0, %v1152
  %v1154 = vpop.f32.mrf.mxu0
  %v1155 = vadd.f32 0.0, %v1154
  %v1156 = vpop.f32.mrf.mxu0
  %v1157 = vadd.f32 0.0, %v1156
  %1158 = vmatprep.mubr.bf16.mxu0 0
  %1159 = vmatmul.mubr.bf16.gmra.mxu0 %v1033
  %v1160 = vpop.f32.mrf.mxu0
  %v1161 = vadd.f32 0.0, %v1160
  %v1162 = vpop.f32.mrf.mxu0
  %v1163 = vadd.f32 0.0, %v1162
  %v1164 = vpop.f32.mrf.mxu0
  %v1165 = vadd.f32 0.0, %v1164
  %v1166 = vpop.f32.mrf.mxu0
  %v1167 = vadd.f32 0.0, %v1166
  %1168 = vdwg.mxu0
  %v1169 = vadd.f32 %v1001, %v1151
  %v1170 = vadd.f32 %v1002, %v1153
  %v1171 = vadd.f32 %v1003, %v1155
  %v1172 = vadd.f32 %v1004, %v1157
  %v1173 = vadd.f32 %v1005, %v1161
  %v1174 = vadd.f32 %v1006, %v1163
  %v1175 = vadd.f32 %v1007, %v1165
  %v1176 = vadd.f32 %v1008, %v1167
  %s1177 = scalar_lea.vmem %s3, 512
  %v1178 = vld [vmem:[%s1177] sm:$0xff]
  %v1179 = vld [vmem:[%s1177 + $0x8] sm:$0xff]
  %v1180 = vld [vmem:[%s1177 + $0x10] sm:$0xff]
  %v1181 = vld [vmem:[%s1177 + $0x18] sm:$0xff]
  %v1182 = vld [vmem:[%s1177 + $0x20] sm:$0xff]
  %v1183 = vld [vmem:[%s1177 + $0x28] sm:$0xff]
  %v1184 = vld [vmem:[%s1177 + $0x30] sm:$0xff]
  %v1185 = vld [vmem:[%s1177 + $0x38] sm:$0xff]
  %v1186 = vld [vmem:[%s1177 + $0x40] sm:$0xff]
  %v1187 = vld [vmem:[%s1177 + $0x48] sm:$0xff]
  %v1188 = vld [vmem:[%s1177 + $0x50] sm:$0xff]
  %v1189 = vld [vmem:[%s1177 + $0x58] sm:$0xff]
  %v1190 = vld [vmem:[%s1177 + $0x60] sm:$0xff]
  %v1191 = vld [vmem:[%s1177 + $0x68] sm:$0xff]
  %v1192 = vld [vmem:[%s1177 + $0x70] sm:$0xff]
  %v1193 = vld [vmem:[%s1177 + $0x78] sm:$0xff]
  %v1210 = vunpack.c.l.b16 %v1178
  %v1211 = vunpack.c.h.b16 %v1178
  %v1212 = vunpack.c.l.b16 %v1179
  %v1213 = vunpack.c.h.b16 %v1179
  %v1214 = vunpack.c.l.b16 %v1180
  %v1215 = vunpack.c.h.b16 %v1180
  %v1216 = vunpack.c.l.b16 %v1181
  %v1217 = vunpack.c.h.b16 %v1181
  %v1218 = vunpack.c.l.b16 %v1182
  %v1219 = vunpack.c.h.b16 %v1182
  %v1220 = vunpack.c.l.b16 %v1183
  %v1221 = vunpack.c.h.b16 %v1183
  %v1222 = vunpack.c.l.b16 %v1184
  %v1223 = vunpack.c.h.b16 %v1184
  %v1224 = vunpack.c.l.b16 %v1185
  %v1225 = vunpack.c.h.b16 %v1185
  %v1226 = vunpack.c.l.b16 %v1186
  %v1227 = vunpack.c.h.b16 %v1186
  %v1228 = vunpack.c.l.b16 %v1187
  %v1229 = vunpack.c.h.b16 %v1187
  %v1230 = vunpack.c.l.b16 %v1188
  %v1231 = vunpack.c.h.b16 %v1188
  %v1232 = vunpack.c.l.b16 %v1189
  %v1233 = vunpack.c.h.b16 %v1189
  %v1234 = vunpack.c.l.b16 %v1190
  %v1235 = vunpack.c.h.b16 %v1190
  %v1236 = vunpack.c.l.b16 %v1191
  %v1237 = vunpack.c.h.b16 %v1191
  %v1238 = vunpack.c.l.b16 %v1192
  %v1239 = vunpack.c.h.b16 %v1192
  %v1240 = vunpack.c.l.b16 %v1193
  %v1241 = vunpack.c.h.b16 %v1193
  %v1242 = vpack.c.b16 %v1212, %v1210
  %v1243 = vpack.c.b16 %v1213, %v1211
  %v1244 = vpack.c.b16 %v1216, %v1214
  %v1245 = vpack.c.b16 %v1217, %v1215
  %v1246 = vpack.c.b16 %v1220, %v1218
  %v1247 = vpack.c.b16 %v1221, %v1219
  %v1248 = vpack.c.b16 %v1224, %v1222
  %v1249 = vpack.c.b16 %v1225, %v1223
  %v1250 = vpack.c.b16 %v1228, %v1226
  %v1251 = vpack.c.b16 %v1229, %v1227
  %v1252 = vpack.c.b16 %v1232, %v1230
  %v1253 = vpack.c.b16 %v1233, %v1231
  %v1254 = vpack.c.b16 %v1236, %v1234
  %v1255 = vpack.c.b16 %v1237, %v1235
  %v1256 = vpack.c.b16 %v1240, %v1238
  %v1257 = vpack.c.b16 %v1241, %v1239
  %1274 = vmatprep.subr.bf16.mxu0 %v1257
  %1275 = vmatpush1.bf16.msra.mxu0 %v1256
  %1276 = vmatprep.subr.bf16.mxu0 %v1255
  %1277 = vmatpush1.bf16.msra.mxu0 %v1254
  %1278 = vmatprep.subr.bf16.mxu0 %v1253
  %1279 = vmatpush1.bf16.msra.mxu0 %v1252
  %1280 = vmatprep.subr.bf16.mxu0 %v1251
  %1281 = vmatpush1.bf16.msra.mxu0 %v1250
  %1282 = vmatprep.subr.bf16.mxu0 %v1249
  %1283 = vmatpush1.bf16.msra.mxu0 %v1248
  %1284 = vmatprep.subr.bf16.mxu0 %v1247
  %1285 = vmatpush1.bf16.msra.mxu0 %v1246
  %1286 = vmatprep.subr.bf16.mxu0 %v1245
  %1287 = vmatpush1.bf16.msra.mxu0 %v1244
  %1288 = vmatprep.subr.bf16.mxu0 %v1243
  %1289 = vmatpush1.bf16.msra.mxu0 %v1242
  %1290 = vmatprep.subr.bf16.mxu0 0
  %1291 = vmatpush2.bf16.msra.mxu0 0
  %1292 = vmatprep.subr.bf16.mxu0 0
  %1293 = vmatpush2.bf16.msra.mxu0 0
  %1294 = vmatprep.subr.bf16.mxu0 0
  %1295 = vmatpush2.bf16.msra.mxu0 0
  %1296 = vmatprep.subr.bf16.mxu0 0
  %1297 = vmatpush2.bf16.msra.mxu0 0
  %1298 = vmatprep.subr.bf16.mxu0 0
  %1299 = vmatpush2.bf16.msra.mxu0 0
  %1300 = vmatprep.subr.bf16.mxu0 0
  %1301 = vmatpush2.bf16.msra.mxu0 0
  %1302 = vmatprep.subr.bf16.mxu0 0
  %1303 = vmatpush2.bf16.msra.mxu0 0
  %1304 = vmatprep.subr.bf16.mxu0 0
  %1305 = vmatpush2.bf16.msra.mxu0 0
  %1306 = vmatprep.mubr.bf16.mxu0 0
  %1307 = vmatmul.mubr.bf16.gmra.mxu0 %v536
  %v1308 = vpop.f32.mrf.mxu0
  %v1309 = vadd.f32 0.0, %v1308
  %v1310 = vpop.f32.mrf.mxu0
  %v1311 = vadd.f32 0.0, %v1310
  %v1312 = vpop.f32.mrf.mxu0
  %v1313 = vadd.f32 0.0, %v1312
  %v1314 = vpop.f32.mrf.mxu0
  %v1315 = vadd.f32 0.0, %v1314
  %1316 = vmatprep.mubr.bf16.mxu0 0
  %1317 = vmatmul.mubr.bf16.gmra.mxu0 %v537
  %v1318 = vpop.f32.mrf.mxu0
  %v1319 = vadd.f32 0.0, %v1318
  %v1320 = vpop.f32.mrf.mxu0
  %v1321 = vadd.f32 0.0, %v1320
  %v1322 = vpop.f32.mrf.mxu0
  %v1323 = vadd.f32 0.0, %v1322
  %v1324 = vpop.f32.mrf.mxu0
  %v1325 = vadd.f32 0.0, %v1324
  %1326 = vdwg.mxu0
  %v1327 = vadd.f32 %v1169, %v1309
  %v1328 = vadd.f32 %v1170, %v1311
  %v1329 = vadd.f32 %v1171, %v1313
  %v1330 = vadd.f32 %v1172, %v1315
  %v1331 = vadd.f32 %v1173, %v1319
  %v1332 = vadd.f32 %v1174, %v1321
  %v1333 = vadd.f32 %v1175, %v1323
  %v1334 = vadd.f32 %v1176, %v1325
  %1335 = vmatprep.subr.bf16.mxu0 %v637
  %1336 = vmatpush1.bf16.msra.mxu0 %v636
  %1337 = vmatprep.subr.bf16.mxu0 %v635
  %1338 = vmatpush1.bf16.msra.mxu0 %v634
  %1339 = vmatprep.subr.bf16.mxu0 %v633
  %1340 = vmatpush1.bf16.msra.mxu0 %v632
  %1341 = vmatprep.subr.bf16.mxu0 %v631
  %1342 = vmatpush1.bf16.msra.mxu0 %v630
  %1343 = vmatprep.subr.bf16.mxu0 %v629
  %1344 = vmatpush1.bf16.msra.mxu0 %v628
  %1345 = vmatprep.subr.bf16.mxu0 %v627
  %1346 = vmatpush1.bf16.msra.mxu0 %v626
  %1347 = vmatprep.subr.bf16.mxu0 %v625
  %1348 = vmatpush1.bf16.msra.mxu0 %v624
  %1349 = vmatprep.subr.bf16.mxu0 %v623
  %1350 = vmatpush1.bf16.msra.mxu0 %v622
  %1351 = vmatprep.subr.bf16.mxu0 0
  %1352 = vmatpush2.bf16.msra.mxu0 0
  %1353 = vmatprep.subr.bf16.mxu0 0
  %1354 = vmatpush2.bf16.msra.mxu0 0
  %1355 = vmatprep.subr.bf16.mxu0 0
  %1356 = vmatpush2.bf16.msra.mxu0 0
  %1357 = vmatprep.subr.bf16.mxu0 0
  %1358 = vmatpush2.bf16.msra.mxu0 0
  %1359 = vmatprep.subr.bf16.mxu0 0
  %1360 = vmatpush2.bf16.msra.mxu0 0
  %1361 = vmatprep.subr.bf16.mxu0 0
  %1362 = vmatpush2.bf16.msra.mxu0 0
  %1363 = vmatprep.subr.bf16.mxu0 0
  %1364 = vmatpush2.bf16.msra.mxu0 0
  %1365 = vmatprep.subr.bf16.mxu0 0
  %1366 = vmatpush2.bf16.msra.mxu0 0
  %1367 = vmatprep.mubr.bf16.mxu0 0
  %1368 = vmatmul.mubr.bf16.gmra.mxu0 %v863
  %v1369 = vpop.f32.mrf.mxu0
  %v1370 = vadd.f32 0.0, %v1369
  %v1371 = vpop.f32.mrf.mxu0
  %v1372 = vadd.f32 0.0, %v1371
  %v1373 = vpop.f32.mrf.mxu0
  %v1374 = vadd.f32 0.0, %v1373
  %v1375 = vpop.f32.mrf.mxu0
  %v1376 = vadd.f32 0.0, %v1375
  %1377 = vmatprep.mubr.bf16.mxu0 0
  %1378 = vmatmul.mubr.bf16.gmra.mxu0 %v865
  %v1379 = vpop.f32.mrf.mxu0
  %v1380 = vadd.f32 0.0, %v1379
  %v1381 = vpop.f32.mrf.mxu0
  %v1382 = vadd.f32 0.0, %v1381
  %v1383 = vpop.f32.mrf.mxu0
  %v1384 = vadd.f32 0.0, %v1383
  %v1385 = vpop.f32.mrf.mxu0
  %v1386 = vadd.f32 0.0, %v1385
  %1387 = vdwg.mxu0
  %1388 = vmatprep.subr.bf16.mxu0 %v770
  %1389 = vmatpush1.bf16.msra.mxu0 %v769
  %1390 = vmatprep.subr.bf16.mxu0 %v768
  %1391 = vmatpush1.bf16.msra.mxu0 %v767
  %1392 = vmatprep.subr.bf16.mxu0 %v766
  %1393 = vmatpush1.bf16.msra.mxu0 %v765
  %1394 = vmatprep.subr.bf16.mxu0 %v764
  %1395 = vmatpush1.bf16.msra.mxu0 %v763
  %1396 = vmatprep.subr.bf16.mxu0 %v762
  %1397 = vmatpush1.bf16.msra.mxu0 %v761
  %1398 = vmatprep.subr.bf16.mxu0 %v760
  %1399 = vmatpush1.bf16.msra.mxu0 %v759
  %1400 = vmatprep.subr.bf16.mxu0 %v758
  %1401 = vmatpush1.bf16.msra.mxu0 %v757
  %1402 = vmatprep.subr.bf16.mxu0 %v756
  %1403 = vmatpush1.bf16.msra.mxu0 %v755
  %1404 = vmatprep.subr.bf16.mxu0 0
  %1405 = vmatpush2.bf16.msra.mxu0 0
  %1406 = vmatprep.subr.bf16.mxu0 0
  %1407 = vmatpush2.bf16.msra.mxu0 0
  %1408 = vmatprep.subr.bf16.mxu0 0
  %1409 = vmatpush2.bf16.msra.mxu0 0
  %1410 = vmatprep.subr.bf16.mxu0 0
  %1411 = vmatpush2.bf16.msra.mxu0 0
  %1412 = vmatprep.subr.bf16.mxu0 0
  %1413 = vmatpush2.bf16.msra.mxu0 0
  %1414 = vmatprep.subr.bf16.mxu0 0
  %1415 = vmatpush2.bf16.msra.mxu0 0
  %1416 = vmatprep.subr.bf16.mxu0 0
  %1417 = vmatpush2.bf16.msra.mxu0 0
  %1418 = vmatprep.subr.bf16.mxu0 0
  %1419 = vmatpush2.bf16.msra.mxu0 0
  %1420 = vmatprep.mubr.bf16.mxu0 0
  %1421 = vmatmul.mubr.bf16.gmra.mxu0 %v538
  %v1422 = vpop.f32.mrf.mxu0
  %v1423 = vadd.f32 %v1370, %v1422
  %v1424 = vpop.f32.mrf.mxu0
  %v1425 = vadd.f32 %v1372, %v1424
  %v1426 = vpop.f32.mrf.mxu0
  %v1427 = vadd.f32 %v1374, %v1426
  %v1428 = vpop.f32.mrf.mxu0
  %v1429 = vadd.f32 %v1376, %v1428
  %1430 = vmatprep.mubr.bf16.mxu0 0
  %1431 = vmatmul.mubr.bf16.gmra.mxu0 %v539
  %v1432 = vpop.f32.mrf.mxu0
  %v1433 = vadd.f32 %v1380, %v1432
  %v1434 = vpop.f32.mrf.mxu0
  %v1435 = vadd.f32 %v1382, %v1434
  %v1436 = vpop.f32.mrf.mxu0
  %v1437 = vadd.f32 %v1384, %v1436
  %v1438 = vpop.f32.mrf.mxu0
  %v1439 = vadd.f32 %v1386, %v1438
  %1440 = vdwg.mxu0
  %1441 = vmatprep.subr.bf16.mxu0 %v931
  %1442 = vmatpush1.bf16.msra.mxu0 %v930
  %1443 = vmatprep.subr.bf16.mxu0 %v929
  %1444 = vmatpush1.bf16.msra.mxu0 %v928
  %1445 = vmatprep.subr.bf16.mxu0 %v927
  %1446 = vmatpush1.bf16.msra.mxu0 %v926
  %1447 = vmatprep.subr.bf16.mxu0 %v925
  %1448 = vmatpush1.bf16.msra.mxu0 %v924
  %1449 = vmatprep.subr.bf16.mxu0 %v923
  %1450 = vmatpush1.bf16.msra.mxu0 %v922
  %1451 = vmatprep.subr.bf16.mxu0 %v921
  %1452 = vmatpush1.bf16.msra.mxu0 %v920
  %1453 = vmatprep.subr.bf16.mxu0 %v919
  %1454 = vmatpush1.bf16.msra.mxu0 %v918
  %1455 = vmatprep.subr.bf16.mxu0 %v917
  %1456 = vmatpush1.bf16.msra.mxu0 %v916
  %1457 = vmatprep.subr.bf16.mxu0 0
  %1458 = vmatpush2.bf16.msra.mxu0 0
  %1459 = vmatprep.subr.bf16.mxu0 0
  %1460 = vmatpush2.bf16.msra.mxu0 0
  %1461 = vmatprep.subr.bf16.mxu0 0
  %1462 = vmatpush2.bf16.msra.mxu0 0
  %1463 = vmatprep.subr.bf16.mxu0 0
  %1464 = vmatpush2.bf16.msra.mxu0 0
  %1465 = vmatprep.subr.bf16.mxu0 0
  %1466 = vmatpush2.bf16.msra.mxu0 0
  %1467 = vmatprep.subr.bf16.mxu0 0
  %1468 = vmatpush2.bf16.msra.mxu0 0
  %1469 = vmatprep.subr.bf16.mxu0 0
  %1470 = vmatpush2.bf16.msra.mxu0 0
  %1471 = vmatprep.subr.bf16.mxu0 0
  %1472 = vmatpush2.bf16.msra.mxu0 0
  %1473 = vmatprep.mubr.bf16.mxu0 0
  %1474 = vmatmul.mubr.bf16.gmra.mxu0 %v1031
  %v1475 = vpop.f32.mrf.mxu0
  %v1476 = vadd.f32 0.0, %v1475
  %v1477 = vpop.f32.mrf.mxu0
  %v1478 = vadd.f32 0.0, %v1477
  %v1479 = vpop.f32.mrf.mxu0
  %v1480 = vadd.f32 0.0, %v1479
  %v1481 = vpop.f32.mrf.mxu0
  %v1482 = vadd.f32 0.0, %v1481
  %1483 = vmatprep.mubr.bf16.mxu0 0
  %1484 = vmatmul.mubr.bf16.gmra.mxu0 %v1033
  %v1485 = vpop.f32.mrf.mxu0
  %v1486 = vadd.f32 0.0, %v1485
  %v1487 = vpop.f32.mrf.mxu0
  %v1488 = vadd.f32 0.0, %v1487
  %v1489 = vpop.f32.mrf.mxu0
  %v1490 = vadd.f32 0.0, %v1489
  %v1491 = vpop.f32.mrf.mxu0
  %v1492 = vadd.f32 0.0, %v1491
  %1493 = vdwg.mxu0
  %v1494 = vadd.f32 %v1423, %v1476
  %v1495 = vadd.f32 %v1425, %v1478
  %v1496 = vadd.f32 %v1427, %v1480
  %v1497 = vadd.f32 %v1429, %v1482
  %v1498 = vadd.f32 %v1433, %v1486
  %v1499 = vadd.f32 %v1435, %v1488
  %v1500 = vadd.f32 %v1437, %v1490
  %v1501 = vadd.f32 %v1439, %v1492
  %1502 = vmatprep.subr.bf16.mxu0 %v1099
  %1503 = vmatpush1.bf16.msra.mxu0 %v1098
  %1504 = vmatprep.subr.bf16.mxu0 %v1097
  %1505 = vmatpush1.bf16.msra.mxu0 %v1096
  %1506 = vmatprep.subr.bf16.mxu0 %v1095
  %1507 = vmatpush1.bf16.msra.mxu0 %v1094
  %1508 = vmatprep.subr.bf16.mxu0 %v1093
  %1509 = vmatpush1.bf16.msra.mxu0 %v1092
  %1510 = vmatprep.subr.bf16.mxu0 %v1091
  %1511 = vmatpush1.bf16.msra.mxu0 %v1090
  %1512 = vmatprep.subr.bf16.mxu0 %v1089
  %1513 = vmatpush1.bf16.msra.mxu0 %v1088
  %1514 = vmatprep.subr.bf16.mxu0 %v1087
  %1515 = vmatpush1.bf16.msra.mxu0 %v1086
  %1516 = vmatprep.subr.bf16.mxu0 %v1085
  %1517 = vmatpush1.bf16.msra.mxu0 %v1084
  %1518 = vmatprep.subr.bf16.mxu0 0
  %1519 = vmatpush2.bf16.msra.mxu0 0
  %1520 = vmatprep.subr.bf16.mxu0 0
  %1521 = vmatpush2.bf16.msra.mxu0 0
  %1522 = vmatprep.subr.bf16.mxu0 0
  %1523 = vmatpush2.bf16.msra.mxu0 0
  %1524 = vmatprep.subr.bf16.mxu0 0
  %1525 = vmatpush2.bf16.msra.mxu0 0
  %1526 = vmatprep.subr.bf16.mxu0 0
  %1527 = vmatpush2.bf16.msra.mxu0 0
  %1528 = vmatprep.subr.bf16.mxu0 0
  %1529 = vmatpush2.bf16.msra.mxu0 0
  %1530 = vmatprep.subr.bf16.mxu0 0
  %1531 = vmatpush2.bf16.msra.mxu0 0
  %1532 = vmatprep.subr.bf16.mxu0 0
  %1533 = vmatpush2.bf16.msra.mxu0 0
  %1534 = vmatprep.mubr.bf16.mxu0 0
  %1535 = vmatmul.mubr.bf16.gmra.mxu0 %v536
  %v1536 = vpop.f32.mrf.mxu0
  %v1537 = vadd.f32 0.0, %v1536
  %v1538 = vpop.f32.mrf.mxu0
  %v1539 = vadd.f32 0.0, %v1538
  %v1540 = vpop.f32.mrf.mxu0
  %v1541 = vadd.f32 0.0, %v1540
  %v1542 = vpop.f32.mrf.mxu0
  %v1543 = vadd.f32 0.0, %v1542
  %1544 = vmatprep.mubr.bf16.mxu0 0
  %1545 = vmatmul.mubr.bf16.gmra.mxu0 %v537
  %v1546 = vpop.f32.mrf.mxu0
  %v1547 = vadd.f32 0.0, %v1546
  %v1548 = vpop.f32.mrf.mxu0
  %v1549 = vadd.f32 0.0, %v1548
  %v1550 = vpop.f32.mrf.mxu0
  %v1551 = vadd.f32 0.0, %v1550
  %v1552 = vpop.f32.mrf.mxu0
  %v1553 = vadd.f32 0.0, %v1552
  %1554 = vdwg.mxu0
  %v1555 = vadd.f32 %v1494, %v1537
  %v1556 = vadd.f32 %v1495, %v1539
  %v1557 = vadd.f32 %v1496, %v1541
  %v1558 = vadd.f32 %v1497, %v1543
  %v1559 = vadd.f32 %v1498, %v1547
  %v1560 = vadd.f32 %v1499, %v1549
  %v1561 = vadd.f32 %v1500, %v1551
  %v1562 = vadd.f32 %v1501, %v1553
  %1563 = vmatprep.subr.bf16.mxu0 %v1257
  %1564 = vmatpush1.bf16.msra.mxu0 %v1256
  %1565 = vmatprep.subr.bf16.mxu0 %v1255
  %1566 = vmatpush1.bf16.msra.mxu0 %v1254
  %1567 = vmatprep.subr.bf16.mxu0 %v1253
  %1568 = vmatpush1.bf16.msra.mxu0 %v1252
  %1569 = vmatprep.subr.bf16.mxu0 %v1251
  %1570 = vmatpush1.bf16.msra.mxu0 %v1250
  %1571 = vmatprep.subr.bf16.mxu0 %v1249
  %1572 = vmatpush1.bf16.msra.mxu0 %v1248
  %1573 = vmatprep.subr.bf16.mxu0 %v1247
  %1574 = vmatpush1.bf16.msra.mxu0 %v1246
  %1575 = vmatprep.subr.bf16.mxu0 %v1245
  %1576 = vmatpush1.bf16.msra.mxu0 %v1244
  %1577 = vmatprep.subr.bf16.mxu0 %v1243
  %1578 = vmatpush1.bf16.msra.mxu0 %v1242
  %1579 = vmatprep.subr.bf16.mxu0 0
  %1580 = vmatpush2.bf16.msra.mxu0 0
  %1581 = vmatprep.subr.bf16.mxu0 0
  %1582 = vmatpush2.bf16.msra.mxu0 0
  %1583 = vmatprep.subr.bf16.mxu0 0
  %1584 = vmatpush2.bf16.msra.mxu0 0
  %1585 = vmatprep.subr.bf16.mxu0 0
  %1586 = vmatpush2.bf16.msra.mxu0 0
  %1587 = vmatprep.subr.bf16.mxu0 0
  %1588 = vmatpush2.bf16.msra.mxu0 0
  %1589 = vmatprep.subr.bf16.mxu0 0
  %1590 = vmatpush2.bf16.msra.mxu0 0
  %1591 = vmatprep.subr.bf16.mxu0 0
  %1592 = vmatpush2.bf16.msra.mxu0 0
  %1593 = vmatprep.subr.bf16.mxu0 0
  %1594 = vmatpush2.bf16.msra.mxu0 0
  %1595 = vmatprep.mubr.bf16.mxu0 0
  %1596 = vmatmul.mubr.bf16.gmra.mxu0 %v539
  %v1597 = vpop.f32.mrf.mxu0
  %v1598 = vadd.f32 0.0, %v1597
  %v1599 = vpop.f32.mrf.mxu0
  %v1600 = vadd.f32 0.0, %v1599
  %v1601 = vpop.f32.mrf.mxu0
  %v1602 = vadd.f32 0.0, %v1601
  %v1603 = vpop.f32.mrf.mxu0
  %v1604 = vadd.f32 0.0, %v1603
  %1605 = vmatprep.mubr.bf16.mxu0 0
  %1606 = vmatmul.mubr.bf16.gmra.mxu0 %v540
  %v1607 = vpop.f32.mrf.mxu0
  %v1608 = vadd.f32 0.0, %v1607
  %v1609 = vpop.f32.mrf.mxu0
  %v1610 = vadd.f32 0.0, %v1609
  %v1611 = vpop.f32.mrf.mxu0
  %v1612 = vadd.f32 0.0, %v1611
  %v1613 = vpop.f32.mrf.mxu0
  %v1614 = vadd.f32 0.0, %v1613
  %1615 = vdwg.mxu0
  %v1616 = vadd.f32 %v1555, %v1598
  %v1617 = vadd.f32 %v1556, %v1600
  %v1618 = vadd.f32 %v1557, %v1602
  %v1619 = vadd.f32 %v1558, %v1604
  %v1620 = vadd.f32 %v1559, %v1608
  %v1621 = vadd.f32 %v1560, %v1610
  %v1622 = vadd.f32 %v1561, %v1612
  %v1623 = vadd.f32 %v1562, %v1614
  %v1624 = vmax.f32 %v1327, %v1328
  %v1625 = vmax.f32 %v1329, %v1330
  %v1626 = vmax.f32 %v1331, %v1332
  %v1627 = vmax.f32 %v1333, %v1334
  %v1628 = vmax.f32 %v1616, %v1617
  %v1629 = vmax.f32 %v1618, %v1619
  %v1630 = vmax.f32 %v1620, %v1621
  %v1631 = vmax.f32 %v1622, %v1623
  %v1632 = vmax.f32 %v1624, %v1628
  %v1633 = vmax.f32 %v1625, %v1629
  %v1634 = vmax.f32 %v1626, %v1630
  %v1635 = vmax.f32 %v1627, %v1631
  %v1636 = vld [vmem:[%s4] sm:$0x1]
  %v1638 = vlaneseq
  %v1639 = vshrl.u32 %v1638, 7
  %v1640 = vsub.s32 0, %v1639
  %v1641 = vrot.slane %v1636, %v1640
  %v1643 = vadd.f32 %v1632, %v1641
  %v1644 = vadd.f32 %v1633, %v1641
  %v1645 = vadd.f32 %v1634, %v1641
  %v1646 = vadd.f32 %v1635, %v1641
  %v1647 = vmax.f32 %v1643, 0.0
  %v1648 = vmax.f32 %v1644, 0.0
  %v1649 = vmax.f32 %v1645, 0.0
  %v1650 = vmax.f32 %v1646, 0.0
  %v1651 = vpack.c.bf16 %v1648, %v1647
  %v1652 = vpack.c.bf16 %v1650, %v1649
  %v1653 = vld [vmem:[%s6] sm:$0x1]
  %v1654 = vld [vmem:[%s5] sm:$0xf]
  %v1655 = vld [vmem:[%s5 + $0x4] sm:$0xf]
  %v1656 = vld [vmem:[%s5 + $0x8] sm:$0xf]
  %v1657 = vld [vmem:[%s5 + $0xc] sm:$0xf]
  %v1658 = vld [vmem:[%s5 + $0x10] sm:$0xf]
  %v1659 = vld [vmem:[%s5 + $0x14] sm:$0xf]
  %v1660 = vld [vmem:[%s5 + $0x18] sm:$0xf]
  %v1661 = vld [vmem:[%s5 + $0x1c] sm:$0xf]
  %v1662 = vld [vmem:[%s5 + $0x20] sm:$0xf]
  %v1663 = vld [vmem:[%s5 + $0x24] sm:$0xf]
  %v1664 = vld [vmem:[%s5 + $0x28] sm:$0xf]
  %v1665 = vld [vmem:[%s5 + $0x2c] sm:$0xf]
  %v1666 = vld [vmem:[%s5 + $0x30] sm:$0xf]
  %v1667 = vld [vmem:[%s5 + $0x34] sm:$0xf]
  %v1668 = vld [vmem:[%s5 + $0x38] sm:$0xf]
  %v1669 = vld [vmem:[%s5 + $0x3c] sm:$0xf]
  %v1686 = vunpack.c.l.b16 %v1654
  %v1687 = vunpack.c.l.b16 %v1655
  %v1688 = vunpack.c.l.b16 %v1656
  %v1689 = vunpack.c.l.b16 %v1657
  %v1690 = vunpack.c.l.b16 %v1658
  %v1691 = vunpack.c.l.b16 %v1659
  %v1692 = vunpack.c.l.b16 %v1660
  %v1693 = vunpack.c.l.b16 %v1661
  %v1694 = vunpack.c.l.b16 %v1662
  %v1695 = vunpack.c.l.b16 %v1663
  %v1696 = vunpack.c.l.b16 %v1664
  %v1697 = vunpack.c.l.b16 %v1665
  %v1698 = vunpack.c.l.b16 %v1666
  %v1699 = vunpack.c.l.b16 %v1667
  %v1700 = vunpack.c.l.b16 %v1668
  %v1701 = vunpack.c.l.b16 %v1669
  %v1702 = vpack.c.b16 %v1687, %v1686
  %v1703 = vpack.c.b16 %v1689, %v1688
  %v1704 = vpack.c.b16 %v1691, %v1690
  %v1705 = vpack.c.b16 %v1693, %v1692
  %v1706 = vpack.c.b16 %v1695, %v1694
  %v1707 = vpack.c.b16 %v1697, %v1696
  %v1708 = vpack.c.b16 %v1699, %v1698
  %v1709 = vpack.c.b16 %v1701, %v1700
  %1718 = vmatprep.subr.bf16.mxu0 0
  %1719 = vmatpush1.bf16.msra.mxu0 %v1709
  %1720 = vmatprep.subr.bf16.mxu0 0
  %1721 = vmatpush1.bf16.msra.mxu0 %v1708
  %1722 = vmatprep.subr.bf16.mxu0 0
  %1723 = vmatpush1.bf16.msra.mxu0 %v1707
  %1724 = vmatprep.subr.bf16.mxu0 0
  %1725 = vmatpush1.bf16.msra.mxu0 %v1706
  %1726 = vmatprep.subr.bf16.mxu0 0
  %1727 = vmatpush1.bf16.msra.mxu0 %v1705
  %1728 = vmatprep.subr.bf16.mxu0 0
  %1729 = vmatpush1.bf16.msra.mxu0 %v1704
  %1730 = vmatprep.subr.bf16.mxu0 0
  %1731 = vmatpush1.bf16.msra.mxu0 %v1703
  %1732 = vmatprep.subr.bf16.mxu0 0
  %1733 = vmatpush1.bf16.msra.mxu0 %v1702
  %1734 = vmatprep.subr.bf16.mxu0 0
  %1735 = vmatpush2.bf16.msra.mxu0 0
  %1736 = vmatprep.subr.bf16.mxu0 0
  %1737 = vmatpush2.bf16.msra.mxu0 0
  %1738 = vmatprep.subr.bf16.mxu0 0
  %1739 = vmatpush2.bf16.msra.mxu0 0
  %1740 = vmatprep.subr.bf16.mxu0 0
  %1741 = vmatpush2.bf16.msra.mxu0 0
  %1742 = vmatprep.subr.bf16.mxu0 0
  %1743 = vmatpush2.bf16.msra.mxu0 0
  %1744 = vmatprep.subr.bf16.mxu0 0
  %1745 = vmatpush2.bf16.msra.mxu0 0
  %1746 = vmatprep.subr.bf16.mxu0 0
  %1747 = vmatpush2.bf16.msra.mxu0 0
  %1748 = vmatprep.subr.bf16.mxu0 0
  %1749 = vmatpush2.bf16.msra.mxu0 0
  %1750 = vmatprep.mubr.bf16.mxu0 0
  %1751 = vmatmul.mubr.bf16.gmra.mxu0 %v1651
  %v1752 = vpop.f32.mrf.mxu0
  %v1753 = vadd.f32 0.0, %v1752
  %v1754 = vpop.f32.mrf.mxu0
  %v1755 = vpop.f32.mrf.mxu0
  %v1756 = vpop.f32.mrf.mxu0
  %1757 = vdwg.mxu0
  %v1759 = vlaneseq
  %v1760 = vshrl.u32 %v1759, 7
  %v1761 = vsub.s32 0, %v1760
  %v1762 = vrot.slane %v1653, %v1761
  %v1764 = vadd.f32 %v1762, %v1753
  %s1765 = scalar_lea.vmem %s5, 64
  %v1766 = vld [vmem:[%s1765] sm:$0xf]
  %v1767 = vld [vmem:[%s1765 + $0x4] sm:$0xf]
  %v1768 = vld [vmem:[%s1765 + $0x8] sm:$0xf]
  %v1769 = vld [vmem:[%s1765 + $0xc] sm:$0xf]
  %v1770 = vld [vmem:[%s1765 + $0x10] sm:$0xf]
  %v1771 = vld [vmem:[%s1765 + $0x14] sm:$0xf]
  %v1772 = vld [vmem:[%s1765 + $0x18] sm:$0xf]
  %v1773 = vld [vmem:[%s1765 + $0x1c] sm:$0xf]
  %v1774 = vld [vmem:[%s1765 + $0x20] sm:$0xf]
  %v1775 = vld [vmem:[%s1765 + $0x24] sm:$0xf]
  %v1776 = vld [vmem:[%s1765 + $0x28] sm:$0xf]
  %v1777 = vld [vmem:[%s1765 + $0x2c] sm:$0xf]
  %v1778 = vld [vmem:[%s1765 + $0x30] sm:$0xf]
  %v1779 = vld [vmem:[%s1765 + $0x34] sm:$0xf]
  %v1780 = vld [vmem:[%s1765 + $0x38] sm:$0xf]
  %v1781 = vld [vmem:[%s1765 + $0x3c] sm:$0xf]
  %v1783 = vrot.slane %v1651, 4
  %v1801 = vunpack.c.l.b16 %v1766
  %v1802 = vunpack.c.l.b16 %v1767
  %v1803 = vunpack.c.l.b16 %v1768
  %v1804 = vunpack.c.l.b16 %v1769
  %v1805 = vunpack.c.l.b16 %v1770
  %v1806 = vunpack.c.l.b16 %v1771
  %v1807 = vunpack.c.l.b16 %v1772
  %v1808 = vunpack.c.l.b16 %v1773
  %v1809 = vunpack.c.l.b16 %v1774
  %v1810 = vunpack.c.l.b16 %v1775
  %v1811 = vunpack.c.l.b16 %v1776
  %v1812 = vunpack.c.l.b16 %v1777
  %v1813 = vunpack.c.l.b16 %v1778
  %v1814 = vunpack.c.l.b16 %v1779
  %v1815 = vunpack.c.l.b16 %v1780
  %v1816 = vunpack.c.l.b16 %v1781
  %v1817 = vpack.c.b16 %v1802, %v1801
  %v1818 = vpack.c.b16 %v1804, %v1803
  %v1819 = vpack.c.b16 %v1806, %v1805
  %v1820 = vpack.c.b16 %v1808, %v1807
  %v1821 = vpack.c.b16 %v1810, %v1809
  %v1822 = vpack.c.b16 %v1812, %v1811
  %v1823 = vpack.c.b16 %v1814, %v1813
  %v1824 = vpack.c.b16 %v1816, %v1815
  %1833 = vmatprep.subr.bf16.mxu0 0
  %1834 = vmatpush1.bf16.msra.mxu0 %v1824
  %1835 = vmatprep.subr.bf16.mxu0 0
  %1836 = vmatpush1.bf16.msra.mxu0 %v1823
  %1837 = vmatprep.subr.bf16.mxu0 0
  %1838 = vmatpush1.bf16.msra.mxu0 %v1822
  %1839 = vmatprep.subr.bf16.mxu0 0
  %1840 = vmatpush1.bf16.msra.mxu0 %v1821
  %1841 = vmatprep.subr.bf16.mxu0 0
  %1842 = vmatpush1.bf16.msra.mxu0 %v1820
  %1843 = vmatprep.subr.bf16.mxu0 0
  %1844 = vmatpush1.bf16.msra.mxu0 %v1819
  %1845 = vmatprep.subr.bf16.mxu0 0
  %1846 = vmatpush1.bf16.msra.mxu0 %v1818
  %1847 = vmatprep.subr.bf16.mxu0 0
  %1848 = vmatpush1.bf16.msra.mxu0 %v1817
  %1849 = vmatprep.subr.bf16.mxu0 0
  %1850 = vmatpush2.bf16.msra.mxu0 0
  %1851 = vmatprep.subr.bf16.mxu0 0
  %1852 = vmatpush2.bf16.msra.mxu0 0
  %1853 = vmatprep.subr.bf16.mxu0 0
  %1854 = vmatpush2.bf16.msra.mxu0 0
  %1855 = vmatprep.subr.bf16.mxu0 0
  %1856 = vmatpush2.bf16.msra.mxu0 0
  %1857 = vmatprep.subr.bf16.mxu0 0
  %1858 = vmatpush2.bf16.msra.mxu0 0
  %1859 = vmatprep.subr.bf16.mxu0 0
  %1860 = vmatpush2.bf16.msra.mxu0 0
  %1861 = vmatprep.subr.bf16.mxu0 0
  %1862 = vmatpush2.bf16.msra.mxu0 0
  %1863 = vmatprep.subr.bf16.mxu0 0
  %1864 = vmatpush2.bf16.msra.mxu0 0
  %1865 = vmatprep.mubr.bf16.mxu0 0
  %1866 = vmatmul.mubr.bf16.gmra.mxu0 %v1783
  %v1867 = vpop.f32.mrf.mxu0
  %v1868 = vadd.f32 0.0, %v1867
  %v1869 = vpop.f32.mrf.mxu0
  %v1870 = vpop.f32.mrf.mxu0
  %v1871 = vpop.f32.mrf.mxu0
  %1872 = vdwg.mxu0
  %v1873 = vadd.f32 %v1764, %v1868
  %s1874 = scalar_lea.vmem %s5, 128
  %v1875 = vld [vmem:[%s1874] sm:$0xf]
  %v1876 = vld [vmem:[%s1874 + $0x4] sm:$0xf]
  %v1877 = vld [vmem:[%s1874 + $0x8] sm:$0xf]
  %v1878 = vld [vmem:[%s1874 + $0xc] sm:$0xf]
  %v1879 = vld [vmem:[%s1874 + $0x10] sm:$0xf]
  %v1880 = vld [vmem:[%s1874 + $0x14] sm:$0xf]
  %v1881 = vld [vmem:[%s1874 + $0x18] sm:$0xf]
  %v1882 = vld [vmem:[%s1874 + $0x1c] sm:$0xf]
  %v1883 = vld [vmem:[%s1874 + $0x20] sm:$0xf]
  %v1884 = vld [vmem:[%s1874 + $0x24] sm:$0xf]
  %v1885 = vld [vmem:[%s1874 + $0x28] sm:$0xf]
  %v1886 = vld [vmem:[%s1874 + $0x2c] sm:$0xf]
  %v1887 = vld [vmem:[%s1874 + $0x30] sm:$0xf]
  %v1888 = vld [vmem:[%s1874 + $0x34] sm:$0xf]
  %v1889 = vld [vmem:[%s1874 + $0x38] sm:$0xf]
  %v1890 = vld [vmem:[%s1874 + $0x3c] sm:$0xf]
  %v1907 = vunpack.c.l.b16 %v1875
  %v1908 = vunpack.c.l.b16 %v1876
  %v1909 = vunpack.c.l.b16 %v1877
  %v1910 = vunpack.c.l.b16 %v1878
  %v1911 = vunpack.c.l.b16 %v1879
  %v1912 = vunpack.c.l.b16 %v1880
  %v1913 = vunpack.c.l.b16 %v1881
  %v1914 = vunpack.c.l.b16 %v1882
  %v1915 = vunpack.c.l.b16 %v1883
  %v1916 = vunpack.c.l.b16 %v1884
  %v1917 = vunpack.c.l.b16 %v1885
  %v1918 = vunpack.c.l.b16 %v1886
  %v1919 = vunpack.c.l.b16 %v1887
  %v1920 = vunpack.c.l.b16 %v1888
  %v1921 = vunpack.c.l.b16 %v1889
  %v1922 = vunpack.c.l.b16 %v1890
  %v1923 = vpack.c.b16 %v1908, %v1907
  %v1924 = vpack.c.b16 %v1910, %v1909
  %v1925 = vpack.c.b16 %v1912, %v1911
  %v1926 = vpack.c.b16 %v1914, %v1913
  %v1927 = vpack.c.b16 %v1916, %v1915
  %v1928 = vpack.c.b16 %v1918, %v1917
  %v1929 = vpack.c.b16 %v1920, %v1919
  %v1930 = vpack.c.b16 %v1922, %v1921
  %1939 = vmatprep.subr.bf16.mxu0 0
  %1940 = vmatpush1.bf16.msra.mxu0 %v1930
  %1941 = vmatprep.subr.bf16.mxu0 0
  %1942 = vmatpush1.bf16.msra.mxu0 %v1929
  %1943 = vmatprep.subr.bf16.mxu0 0
  %1944 = vmatpush1.bf16.msra.mxu0 %v1928
  %1945 = vmatprep.subr.bf16.mxu0 0
  %1946 = vmatpush1.bf16.msra.mxu0 %v1927
  %1947 = vmatprep.subr.bf16.mxu0 0
  %1948 = vmatpush1.bf16.msra.mxu0 %v1926
  %1949 = vmatprep.subr.bf16.mxu0 0
  %1950 = vmatpush1.bf16.msra.mxu0 %v1925
  %1951 = vmatprep.subr.bf16.mxu0 0
  %1952 = vmatpush1.bf16.msra.mxu0 %v1924
  %1953 = vmatprep.subr.bf16.mxu0 0
  %1954 = vmatpush1.bf16.msra.mxu0 %v1923
  %1955 = vmatprep.subr.bf16.mxu0 0
  %1956 = vmatpush2.bf16.msra.mxu0 0
  %1957 = vmatprep.subr.bf16.mxu0 0
  %1958 = vmatpush2.bf16.msra.mxu0 0
  %1959 = vmatprep.subr.bf16.mxu0 0
  %1960 = vmatpush2.bf16.msra.mxu0 0
  %1961 = vmatprep.subr.bf16.mxu0 0
  %1962 = vmatpush2.bf16.msra.mxu0 0
  %1963 = vmatprep.subr.bf16.mxu0 0
  %1964 = vmatpush2.bf16.msra.mxu0 0
  %1965 = vmatprep.subr.bf16.mxu0 0
  %1966 = vmatpush2.bf16.msra.mxu0 0
  %1967 = vmatprep.subr.bf16.mxu0 0
  %1968 = vmatpush2.bf16.msra.mxu0 0
  %1969 = vmatprep.subr.bf16.mxu0 0
  %1970 = vmatpush2.bf16.msra.mxu0 0
  %1971 = vmatprep.mubr.bf16.mxu0 0
  %1972 = vmatmul.mubr.bf16.gmra.mxu0 %v1652
  %v1973 = vpop.f32.mrf.mxu0
  %v1974 = vadd.f32 0.0, %v1973
  %v1975 = vpop.f32.mrf.mxu0
  %v1976 = vpop.f32.mrf.mxu0
  %v1977 = vpop.f32.mrf.mxu0
  %1978 = vdwg.mxu0
  %v1979 = vadd.f32 %v1873, %v1974
  %s1980 = scalar_lea.vmem %s5, 192
  %v1981 = vld [vmem:[%s1980] sm:$0xf]
  %v1982 = vld [vmem:[%s1980 + $0x4] sm:$0xf]
  %v1983 = vld [vmem:[%s1980 + $0x8] sm:$0xf]
  %v1984 = vld [vmem:[%s1980 + $0xc] sm:$0xf]
  %v1985 = vld [vmem:[%s1980 + $0x10] sm:$0xf]
  %v1986 = vld [vmem:[%s1980 + $0x14] sm:$0xf]
  %v1987 = vld [vmem:[%s1980 + $0x18] sm:$0xf]
  %v1988 = vld [vmem:[%s1980 + $0x1c] sm:$0xf]
  %v1989 = vld [vmem:[%s1980 + $0x20] sm:$0xf]
  %v1990 = vld [vmem:[%s1980 + $0x24] sm:$0xf]
  %v1991 = vld [vmem:[%s1980 + $0x28] sm:$0xf]
  %v1992 = vld [vmem:[%s1980 + $0x2c] sm:$0xf]
  %v1993 = vld [vmem:[%s1980 + $0x30] sm:$0xf]
  %v1994 = vld [vmem:[%s1980 + $0x34] sm:$0xf]
  %v1995 = vld [vmem:[%s1980 + $0x38] sm:$0xf]
  %v1996 = vld [vmem:[%s1980 + $0x3c] sm:$0xf]
  %v1998 = vrot.slane %v1652, 4
  %v2016 = vunpack.c.l.b16 %v1981
  %v2017 = vunpack.c.l.b16 %v1982
  %v2018 = vunpack.c.l.b16 %v1983
  %v2019 = vunpack.c.l.b16 %v1984
  %v2020 = vunpack.c.l.b16 %v1985
  %v2021 = vunpack.c.l.b16 %v1986
  %v2022 = vunpack.c.l.b16 %v1987
  %v2023 = vunpack.c.l.b16 %v1988
  %v2024 = vunpack.c.l.b16 %v1989
  %v2025 = vunpack.c.l.b16 %v1990
  %v2026 = vunpack.c.l.b16 %v1991
  %v2027 = vunpack.c.l.b16 %v1992
  %v2028 = vunpack.c.l.b16 %v1993
  %v2029 = vunpack.c.l.b16 %v1994
  %v2030 = vunpack.c.l.b16 %v1995
  %v2031 = vunpack.c.l.b16 %v1996
  %v2032 = vpack.c.b16 %v2017, %v2016
  %v2033 = vpack.c.b16 %v2019, %v2018
  %v2034 = vpack.c.b16 %v2021, %v2020
  %v2035 = vpack.c.b16 %v2023, %v2022
  %v2036 = vpack.c.b16 %v2025, %v2024
  %v2037 = vpack.c.b16 %v2027, %v2026
  %v2038 = vpack.c.b16 %v2029, %v2028
  %v2039 = vpack.c.b16 %v2031, %v2030
  %2048 = vmatprep.subr.bf16.mxu0 0
  %2049 = vmatpush1.bf16.msra.mxu0 %v2039
  %2050 = vmatprep.subr.bf16.mxu0 0
  %2051 = vmatpush1.bf16.msra.mxu0 %v2038
  %2052 = vmatprep.subr.bf16.mxu0 0
  %2053 = vmatpush1.bf16.msra.mxu0 %v2037
  %2054 = vmatprep.subr.bf16.mxu0 0
  %2055 = vmatpush1.bf16.msra.mxu0 %v2036
  %2056 = vmatprep.subr.bf16.mxu0 0
  %2057 = vmatpush1.bf16.msra.mxu0 %v2035
  %2058 = vmatprep.subr.bf16.mxu0 0
  %2059 = vmatpush1.bf16.msra.mxu0 %v2034
  %2060 = vmatprep.subr.bf16.mxu0 0
  %2061 = vmatpush1.bf16.msra.mxu0 %v2033
  %2062 = vmatprep.subr.bf16.mxu0 0
  %2063 = vmatpush1.bf16.msra.mxu0 %v2032
  %2064 = vmatprep.subr.bf16.mxu0 0
  %2065 = vmatpush2.bf16.msra.mxu0 0
  %2066 = vmatprep.subr.bf16.mxu0 0
  %2067 = vmatpush2.bf16.msra.mxu0 0
  %2068 = vmatprep.subr.bf16.mxu0 0
  %2069 = vmatpush2.bf16.msra.mxu0 0
  %2070 = vmatprep.subr.bf16.mxu0 0
  %2071 = vmatpush2.bf16.msra.mxu0 0
  %2072 = vmatprep.subr.bf16.mxu0 0
  %2073 = vmatpush2.bf16.msra.mxu0 0
  %2074 = vmatprep.subr.bf16.mxu0 0
  %2075 = vmatpush2.bf16.msra.mxu0 0
  %2076 = vmatprep.subr.bf16.mxu0 0
  %2077 = vmatpush2.bf16.msra.mxu0 0
  %2078 = vmatprep.subr.bf16.mxu0 0
  %2079 = vmatpush2.bf16.msra.mxu0 0
  %2080 = vmatprep.mubr.bf16.mxu0 0
  %2081 = vmatmul.mubr.bf16.gmra.mxu0 %v1998
  %v2082 = vpop.f32.mrf.mxu0
  %v2083 = vadd.f32 0.0, %v2082
  %v2084 = vpop.f32.mrf.mxu0
  %v2085 = vpop.f32.mrf.mxu0
  %v2086 = vpop.f32.mrf.mxu0
  %2087 = vdwg.mxu0
  %v2088 = vadd.f32 %v1979, %v2083
  %v2089 = vmax.f32 %v2088, 0.0
  %v2090 = vpack.c.bf16 %v2089, %v2089
  %v2091 = vld [vmem:[%s7] sm:$0xf]
  %v2092 = vld [vmem:[%s7 + $0x4] sm:$0xf]
  %v2093 = vld [vmem:[%s7 + $0x8] sm:$0xf]
  %v2094 = vld [vmem:[%s7 + $0xc] sm:$0xf]
  %v2095 = vld [vmem:[%s7 + $0x10] sm:$0xf]
  %v2096 = vld [vmem:[%s7 + $0x14] sm:$0xf]
  %v2097 = vld [vmem:[%s7 + $0x18] sm:$0x1]
  %v2098 = vld [vmem:[%s8] sm:$0x1]
  %v2100 = vlaneseq
  %v2101 = vshrl.u32 %v2100, 7
  %v2102 = vsub.s32 0, %v2101
  %v2103 = vrot.slane %v2098, %v2102
  %v2112 = vunpack.c.l.b16 %v2091
  %v2113 = vunpack.c.l.b16 %v2092
  %v2114 = vunpack.c.l.b16 %v2093
  %v2115 = vunpack.c.l.b16 %v2094
  %v2116 = vunpack.c.l.b16 %v2095
  %v2117 = vunpack.c.l.b16 %v2096
  %v2118 = vunpack.c.l.b16 %v2097
  %v2119 = vpack.c.b16 %v2113, %v2112
  %v2120 = vpack.c.b16 %v2115, %v2114
  %v2121 = vpack.c.b16 %v2117, %v2116
  %v2122 = vpack.c.b16 %v2118, %v2118
  %vm2126 = vcmask 408576
  %v2128 = vsel %vm2126, %v2090, 0
  %vm2130 = vcmask 1040384
  %v2132 = vsel %vm2130, %v2122, 0
  %2134 = vmatprep.subr.bf16.mxu0 0
  %2135 = vmatpush1.bf16.msra.mxu0 0
  %2136 = vmatprep.subr.bf16.mxu0 0
  %2137 = vmatpush1.bf16.msra.mxu0 0
  %2138 = vmatprep.subr.bf16.mxu0 0
  %2139 = vmatpush1.bf16.msra.mxu0 0
  %2140 = vmatprep.subr.bf16.mxu0 0
  %2141 = vmatpush1.bf16.msra.mxu0 0
  %2142 = vmatprep.subr.bf16.mxu0 0
  %2143 = vmatpush1.bf16.msra.mxu0 %v2132
  %2144 = vmatprep.subr.bf16.mxu0 0
  %2145 = vmatpush1.bf16.msra.mxu0 %v2121
  %2146 = vmatprep.subr.bf16.mxu0 0
  %2147 = vmatpush1.bf16.msra.mxu0 %v2120
  %2148 = vmatprep.subr.bf16.mxu0 0
  %2149 = vmatpush1.bf16.msra.mxu0 %v2119
  %2150 = vmatprep.subr.bf16.mxu0 0
  %2151 = vmatpush2.bf16.msra.mxu0 0
  %2152 = vmatprep.subr.bf16.mxu0 0
  %2153 = vmatpush2.bf16.msra.mxu0 0
  %2154 = vmatprep.subr.bf16.mxu0 0
  %2155 = vmatpush2.bf16.msra.mxu0 0
  %2156 = vmatprep.subr.bf16.mxu0 0
  %2157 = vmatpush2.bf16.msra.mxu0 0
  %2158 = vmatprep.subr.bf16.mxu0 0
  %2159 = vmatpush2.bf16.msra.mxu0 0
  %2160 = vmatprep.subr.bf16.mxu0 0
  %2161 = vmatpush2.bf16.msra.mxu0 0
  %2162 = vmatprep.subr.bf16.mxu0 0
  %2163 = vmatpush2.bf16.msra.mxu0 0
  %2164 = vmatprep.subr.bf16.mxu0 0
  %2165 = vmatpush2.bf16.msra.mxu0 0
  %2166 = vmatprep.mubr.bf16.mxu0 0
  %2167 = vmatmul.mubr.bf16.gmra.mxu0 %v2128
  %v2168 = vpop.f32.mrf.mxu0
  %v2169 = vadd.f32 %v2103, %v2168
  %v2170 = vpop.f32.mrf.mxu0
  %v2171 = vpop.f32.mrf.mxu0
  %v2172 = vpop.f32.mrf.mxu0
  %2173 = vdwg.mxu0
  %2174 = vmax.xlane.f32.xlu0 %v2169
  %v2175 = vpop.xlane.xlu0 %2174
  %v2176 = vsub.f32 %v2169, %v2175
  %v2177 = vmul.f32 %v2176, 1.442695
  %v2178 = vpow.pop %v2177
  %2179 = vadd.xlane.f32.xlu0 %v2178
  %v2180 = vpop.xlane.xlu0 %2179
  %v2181 = vlog2.pop %v2180
  %v2182 = vmul.f32 %v2181, 0.6931472
  %v2183 = vsub.f32 %v2176, %v2182
  %2184 = vst [vmem:[%s9] sm:$0xff] %v2183
  // Predicated region
  $region38: #{net_forward.1} parent=0 // pred_check
    _
  $region39: #{net_forward.1} parent=0 // pred_check_branch
    %2186 = sbr.rel (0) target = $region41
  $region40: #{net_forward.1} parent=0 // pred_region
    _
  $region41: #{net_forward.1} parent=0 // pred_fallthru
    _
  // Predicated region
  $region42: #{net_forward.1} parent=0 // pred_check
    _
  $region43: #{net_forward.1} parent=0 // pred_check_branch
    %2188 = sbr.rel (0) target = $region45
  $region44: #{net_forward.1} parent=0 // pred_region
    _
  $region45: #{net_forward.1} parent=0 // pred_fallthru
    _

</llo_original>
